<compile_context>
chip_gen: v7x
topology: tpu7x:2x2x1
jax: 0.10.0
libtpu: 0.0.40
codegen_flags: <defaults>
</compile_context>

<pallas_src>
import functools

import jax
import jax.numpy as jnp
from jax.experimental import pallas as pl
from jax.experimental.pallas import tpu as pltpu

EPS = 1e-5      # BatchNorm eps (PyTorch default)
LANES = 128


def _round_up(v, m):
    return ((v + m - 1) // m) * m


# ---------------------------------------------------------------------------
# Fused forward kernel: grid = (layer, phase, node_tile)
#   phase 0: z[tile] = (1/deg)*(A_tile @ h) @ Wl + h_tile @ Wr + b  + BN stats
#   phase 1: h[tile] = relu(BN(z[tile])); last step also does pool + MLP head.
# ---------------------------------------------------------------------------
def _fused_kernel(x_ref, a_ref, dinv_ref, pmat_ref, pinv_ref,
                  cw_ref, cb_ref, gam_ref, bet_ref, fw_ref, fb_ref,
                  o_ref,
                  h_ref, z_ref, ssum_ref, ssq_ref,
                  *, num_layers, num_fc, num_tiles, tile_m, n_real):
    l = pl.program_id(0)
    ph = pl.program_id(1)
    t = pl.program_id(2)

    row0 = t * tile_m
    if tile_m & (tile_m - 1) == 0:          # static: hint only for pow2 tiles
        row0 = pl.multiple_of(row0, tile_m)
    inv_n = 1.0 / float(n_real)

    # One-time init of resident node features (very first grid step).
    @pl.when((l == 0) & (ph == 0) & (t == 0))
    def _init_h():
        h_ref[...] = x_ref[...]

    # -------------------- phase 0: SAGE conv tile + BN partial stats --------
    @pl.when(ph == 0)
    def _phase_compute():
        @pl.when(t == 0)
        def _init_stats():
            ssum_ref[...] = jnp.zeros_like(ssum_ref)
            ssq_ref[...] = jnp.zeros_like(ssq_ref)

        h_all = h_ref[...]                                       # bf16 (Np, F)
        # Mean aggregation: binary bf16 adjacency on the MXU, exact f32 1/deg.
        agg = jnp.dot(a_ref[...], h_all,
                      preferred_element_type=jnp.float32)        # (TM, F)
        agg = agg * dinv_ref[...]
        root = h_ref[pl.ds(row0, tile_m), :]                     # bf16 (TM, F)
        z = (jnp.dot(agg.astype(jnp.bfloat16), cw_ref[0],
                     preferred_element_type=jnp.float32)
             + jnp.dot(root, cw_ref[1],
                       preferred_element_type=jnp.float32)
             + cb_ref[...])
        z_ref[pl.ds(row0, tile_m), :] = z

        # Mask padded node rows out of the BatchNorm statistics.
        rows = jax.lax.broadcasted_iota(jnp.int32, (tile_m, 1), 0) + row0
        zm = jnp.where(rows < n_real, z, 0.0)
        ssum_ref[...] += jnp.sum(zm, axis=0, keepdims=True)
        ssq_ref[...] += jnp.sum(zm * z, axis=0, keepdims=True)

    # -------------------- phase 1: BatchNorm + ReLU, write h tile -----------
    @pl.when(ph == 1)
    def _phase_normalize():
        # Training-mode batch stats, biased variance (one-pass sum/sum-sq in
        # f32; clamped >= 0 to guard the rare cancellation case).
        mean = ssum_ref[...] * inv_n
        var = jnp.maximum(ssq_ref[...] * inv_n - mean * mean, 0.0)
        rstd = jax.lax.rsqrt(var + EPS)
        z = z_ref[pl.ds(row0, tile_m), :]
        hn = jnp.maximum((z - mean) * rstd * gam_ref[...] + bet_ref[...], 0.0)
        h_ref[pl.ds(row0, tile_m), :] = hn.astype(jnp.bfloat16)

        # Epilogue once, at the very last grid step: global mean pool + MLP.
        @pl.when((l == num_layers - 1) & (t == num_tiles - 1))
        def _epilogue():
            y = jnp.dot(pmat_ref[...], h_ref[...],
                        preferred_element_type=jnp.float32) * pinv_ref[...]
            for i in range(num_fc):
                y = jnp.dot(y.astype(jnp.bfloat16), fw_ref[i],
                            preferred_element_type=jnp.float32) + fb_ref[i]
                if i != num_fc - 1:
                    y = jnp.maximum(y, 0.0)
            o_ref[...] = y


# ---------------------------------------------------------------------------
# Parameter init (true model dims, deterministic)
# ---------------------------------------------------------------------------
def init_params(key, input_dim, hidden_dim, num_classes, num_layers,
                num_classifier_layers):
    params = {"convs": [], "fcs": []}
    in_dim = input_dim
    for _ in range(num_layers):
        key, k1, k2, k3 = jax.random.split(key, 4)
        scale = 1.0 / jnp.sqrt(jnp.float32(in_dim))
        params["convs"].append(dict(
            wl=jax.random.uniform(k1, (in_dim, hidden_dim), jnp.float32,
                                  -scale, scale),
            wr=jax.random.uniform(k2, (in_dim, hidden_dim), jnp.float32,
                                  -scale, scale),
            bl=jax.random.uniform(k3, (hidden_dim,), jnp.float32,
                                  -scale, scale),
            gamma=jnp.ones((hidden_dim,), jnp.float32),
            beta=jnp.zeros((hidden_dim,), jnp.float32),
        ))
        in_dim = hidden_dim
    for i in range(num_classifier_layers):
        out_dim = num_classes if i == num_classifier_layers - 1 else in_dim // 2
        key, k1, k2 = jax.random.split(key, 3)
        scale = 1.0 / jnp.sqrt(jnp.float32(in_dim))
        params["fcs"].append(dict(
            w=jax.random.uniform(k1, (in_dim, out_dim), jnp.float32,
                                 -scale, scale),
            b=jax.random.uniform(k2, (out_dim,), jnp.float32, -scale, scale),
        ))
        in_dim = out_dim
    return params


# ---------------------------------------------------------------------------
# Packing: pad every feature dim to a common 128-multiple and stack per layer
# ---------------------------------------------------------------------------
def pack_params(params):
    dims = []
    for c in params["convs"]:
        dims += list(c["wl"].shape)
    for f in params["fcs"]:
        dims += list(f["w"].shape)
    fpad = _round_up(max(dims), LANES)

    conv_w, conv_b, gammas, betas = [], [], [], []
    for c in params["convs"]:
        fin, fout = c["wl"].shape
        w = jnp.zeros((2, fpad, fpad), jnp.float32)
        w = w.at[0, :fin, :fout].set(c["wl"])      # neighbor (mean-agg) branch
        w = w.at[1, :fin, :fout].set(c["wr"])      # root / self branch
        conv_w.append(w)
        conv_b.append(jnp.zeros((1, fpad), jnp.float32).at[0, :fout]
                      .set(c["bl"]))
        gammas.append(jnp.ones((1, fpad), jnp.float32).at[0, :fout]
                      .set(c["gamma"]))
        betas.append(jnp.zeros((1, fpad), jnp.float32).at[0, :fout]
                     .set(c["beta"]))

    fc_w, fc_b = [], []
    for f in params["fcs"]:
        fin, fout = f["w"].shape
        fc_w.append(jnp.zeros((fpad, fpad), jnp.float32)
                    .at[:fin, :fout].set(f["w"]))
        fc_b.append(jnp.zeros((1, fpad), jnp.float32).at[0, :fout].set(f["b"]))

    return dict(
        fpad=fpad,
        conv_w=jnp.stack(conv_w).astype(jnp.bfloat16),   # (L, 2, P, P)
        conv_b=jnp.stack(conv_b),                        # (L, 1, P)
        gamma=jnp.stack(gammas),                         # (L, 1, P)
        beta=jnp.stack(betas),                           # (L, 1, P)
        fc_w=jnp.stack(fc_w).astype(jnp.bfloat16),       # (M, P, P)
        fc_b=jnp.stack(fc_b),                            # (M, 1, P)
    )


# ---------------------------------------------------------------------------
# Plain-JAX glue: exact-integer bf16 adjacency / pool matrices + f32 scales
# ---------------------------------------------------------------------------
def build_graph_operators(edge_index, batch, num_nodes, num_graphs,
                          n_pad, g_pad):
    src, dst = edge_index[0], edge_index[1]
    a = jnp.zeros((n_pad, n_pad), jnp.float32).at[dst, src].add(1.0)
    deg_inv = 1.0 / jnp.clip(jnp.sum(a, axis=1, keepdims=True), 1.0)
    onehot = (batch[None, :] ==
              jnp.arange(g_pad, dtype=batch.dtype)[:, None]).astype(jnp.float32)
    pmat = jnp.zeros((g_pad, n_pad), jnp.float32).at[:, :num_nodes].set(onehot)
    pool_inv = 1.0 / jnp.clip(jnp.sum(pmat, axis=1, keepdims=True), 1.0)
    # Small integer / 0-1 entries are exact in bf16; the 1/deg and 1/|graph|
    # scales stay f32 and are applied after the matmuls inside the kernel.
    return (a.astype(jnp.bfloat16), deg_inv,
            pmat.astype(jnp.bfloat16), pool_inv)


def _pick_vmem_limit(resident_bytes):
    """Generation-aware VMEM limit sized from the real footprint."""
    try:
        phys = int(pltpu.get_tpu_info().vmem_capacity_bytes)
    except Exception:
        phys = 64 * 1024 * 1024            # conservative (v7x) fallback
    want = int(resident_bytes * 1.5) + (4 << 20)
    return int(max(16 << 20, min(want, int(phys * 0.85))))


# ---------------------------------------------------------------------------
# Forward pass (one fused pallas_call with a (layer, phase, node-tile) grid)
# ---------------------------------------------------------------------------
def graph_classifier_forward(params, x, edge_index, batch, num_graphs,
                             num_classes):
    n, fin = x.shape
    packed = pack_params(params)
    fpad = packed["fpad"]
    num_layers = len(params["convs"])
    num_fc = len(params["fcs"])

    # 256-row node tiles fill the 256x256 MXU on v6e/v7x; small graphs use one
    # tile rounded to the 8-sublane granule.
    tile_m = 256 if n > 256 else _round_up(n, 8)
    n_pad = _round_up(n, tile_m)
    num_tiles = n_pad // tile_m
    g_pad = _round_up(max(num_graphs, 8), 8)

    x_pad = (jnp.zeros((n_pad, fpad), jnp.float32).at[:n, :fin].set(x)
             .astype(jnp.bfloat16))
    a, deg_inv, pmat, pool_inv = build_graph_operators(
        edge_index, batch, n, num_graphs, n_pad, g_pad)

    kernel = functools.partial(
        _fused_kernel, num_layers=num_layers, num_fc=num_fc,
        num_tiles=num_tiles, tile_m=tile_m, n_real=n)

    grid = (num_layers, 2, num_tiles)
    last_tile = num_tiles - 1

    in_specs = [
        # x: resident once, copied to the h scratch at the first grid step.
        pl.BlockSpec((n_pad, fpad), lambda l, p, t: (0, 0)),
        # Adjacency streamed by row tiles; during the normalize phase (p == 1)
        # the index holds the last block so no redundant DMA is issued.
        pl.BlockSpec((tile_m, n_pad),
                     lambda l, p, t: (t * (1 - p) + last_tile * p, 0)),
        pl.BlockSpec((tile_m, 1), lambda l, p, t: (t, 0)),            # 1/deg
        pl.BlockSpec((g_pad, n_pad), lambda l, p, t: (0, 0)),         # pool mat
        pl.BlockSpec((g_pad, 1), lambda l, p, t: (0, 0)),             # 1/|graph|
        pl.BlockSpec((None, 2, fpad, fpad),
                     lambda l, p, t: (l, 0, 0, 0)),                   # Wl / Wr
        pl.BlockSpec((None, 1, fpad), lambda l, p, t: (l, 0, 0)),     # conv bias
        pl.BlockSpec((None, 1, fpad), lambda l, p, t: (l, 0, 0)),     # gamma
        pl.BlockSpec((None, 1, fpad), lambda l, p, t: (l, 0, 0)),     # beta
        pl.BlockSpec((num_fc, fpad, fpad), lambda l, p, t: (0, 0, 0)),  # fc W
        pl.BlockSpec((num_fc, 1, fpad), lambda l, p, t: (0, 0, 0)),     # fc b
    ]
    out_specs = pl.BlockSpec((g_pad, fpad), lambda l, p, t: (0, 0))
    scratch_shapes = [
        pltpu.VMEM((n_pad, fpad), jnp.bfloat16),   # resident node features h
        pltpu.VMEM((n_pad, fpad), jnp.float32),    # pre-BN activations z
        pltpu.VMEM((1, fpad), jnp.float32),        # BN sum accumulator
        pltpu.VMEM((1, fpad), jnp.float32),        # BN sum-of-squares accum
    ]

    resident_bytes = (
        2 * n_pad * fpad                      # x (bf16)
        + 2 * n_pad * fpad                    # h scratch (bf16)
        + 4 * n_pad * fpad                    # z scratch (f32)
        + 2 * (2 * tile_m * n_pad)            # A tiles, double-buffered (bf16)
        + 2 * g_pad * n_pad                   # pool matrix (bf16)
        + 2 * (2 * 2 * fpad * fpad)           # per-layer conv W, dbl-buffered
        + 2 * num_fc * fpad * fpad            # fc weights (bf16)
        + 4 * g_pad * fpad                    # output block (f32)
        + 4 * (n_pad + g_pad + (3 * num_layers + num_fc) * fpad))
    vmem_limit = _pick_vmem_limit(resident_bytes)

    flops = (2 * num_layers * (n_pad * n_pad * fpad + 2 * n_pad * fpad * fpad)
             + 2 * g_pad * n_pad * fpad + 2 * num_fc * g_pad * fpad * fpad)
    bytes_accessed = (num_layers * 2 * n_pad * n_pad      # A streamed per layer
                      + 2 * n_pad * fpad + 2 * g_pad * n_pad
                      + 4 * num_layers * fpad * fpad
                      + 2 * num_fc * fpad * fpad + 4 * g_pad * fpad)

    out_pad = pl.pallas_call(
        kernel,
        out_shape=jax.ShapeDtypeStruct((g_pad, fpad), jnp.float32),
        grid_spec=pltpu.PrefetchScalarGridSpec(
            num_scalar_prefetch=0,
            grid=grid,
            in_specs=in_specs,
            out_specs=out_specs,
            scratch_shapes=scratch_shapes),
        compiler_params=pltpu.CompilerParams(
            # Scratch-carried state (h, z, BN stats) serializes the grid, so
            # all axes are "arbitrary".  TODO(synk): split node tiles across
            # the two v7x TensorCores (needs cross-core BN-stat exchange).
            dimension_semantics=("arbitrary", "arbitrary", "arbitrary"),
            vmem_limit_bytes=vmem_limit),
        cost_estimate=pl.CostEstimate(
            flops=flops, transcendentals=num_layers * fpad,
            bytes_accessed=bytes_accessed),
    )(x_pad, a, deg_inv, pmat, pool_inv,
      packed["conv_w"], packed["conv_b"], packed["gamma"], packed["beta"],
      packed["fc_w"], packed["fc_b"])

    return out_pad[:num_graphs, :num_classes]


# ---------------------------------------------------------------------------
if __name__ == "__main__":
    # Small synthetic problem: 2 graphs of 8 nodes each.
    NUM_NODES = 16
    INPUT_DIM = 8
    HIDDEN_DIM = 32
    NUM_CLASSES = 4
    NUM_LAYERS = 2
    NUM_CLASSIFIER_LAYERS = 2
    NUM_GRAPHS = 2

    key = jax.random.PRNGKey(0)
    key, kx = jax.random.split(key)
    x = jax.random.normal(kx, (NUM_NODES, INPUT_DIM), jnp.float32)

    # Deterministic edges: bidirectional chain within each 8-node graph.
    src, dst = [], []
    for g in range(NUM_GRAPHS):
        base = g * 8
        for i in range(7):
            src += [base + i, base + i + 1]
            dst += [base + i + 1, base + i]
    edge_index = jnp.array([src, dst], dtype=jnp.int32)

    batch = jnp.array([i // 8 for i in range(NUM_NODES)], dtype=jnp.int32)

    params = init_params(key, INPUT_DIM, HIDDEN_DIM, NUM_CLASSES,
                         NUM_LAYERS, NUM_CLASSIFIER_LAYERS)

    out = graph_classifier_forward(params, x, edge_index, batch, NUM_GRAPHS,
                                   NUM_CLASSES)
    out = jax.block_until_ready(out)
    assert out.shape == (NUM_GRAPHS, NUM_CLASSES)
    print("KERNEL_OK")
</pallas_src>

<mosaic_0001>
module attributes {stable_mosaic.version = 11 : i64} {
  func.func @_fused_kernel(%arg0: i32, %arg1: i32, %arg2: i32, %arg3: memref<16x128xbf16, #tpu.memory_space<vmem>>, %arg4: memref<16x16xbf16, #tpu.memory_space<vmem>>, %arg5: memref<16x1xf32, #tpu.memory_space<vmem>>, %arg6: memref<8x16xbf16, #tpu.memory_space<vmem>>, %arg7: memref<8x1xf32, #tpu.memory_space<vmem>>, %arg8: memref<1x2x128x128xbf16, #tpu.memory_space<vmem>>, %arg9: memref<1x1x128xf32, #tpu.memory_space<vmem>>, %arg10: memref<1x1x128xf32, #tpu.memory_space<vmem>>, %arg11: memref<1x1x128xf32, #tpu.memory_space<vmem>>, %arg12: memref<2x128x128xbf16, #tpu.memory_space<vmem>>, %arg13: memref<2x1x128xf32, #tpu.memory_space<vmem>>, %arg14: memref<8x128xf32, #tpu.memory_space<vmem>>, %arg15: memref<16x128xbf16, #tpu.memory_space<vmem>>, %arg16: memref<16x128xf32, #tpu.memory_space<vmem>>, %arg17: memref<1x128xf32, #tpu.memory_space<vmem>>, %arg18: memref<1x128xf32, #tpu.memory_space<vmem>>) attributes {dimension_semantics = [#tpu.dimension_semantics<arbitrary>, #tpu.dimension_semantics<arbitrary>, #tpu.dimension_semantics<arbitrary>], iteration_bounds = array<i64: 2, 2, 1>, scalar_prefetch = 0 : i64, scratch_operands = 4 : i64, tpu.core_type = #tpu.core_type<tc>, window_params = [{pipeline_mode = #tpu.pipeline_mode<synchronous>, transform_indices = @transform_0, window_bounds = array<i64: 16, 128>}, {transform_indices = @transform_1, window_bounds = array<i64: 16, 16>}, {transform_indices = @transform_2, window_bounds = array<i64: 16, 1>}, {pipeline_mode = #tpu.pipeline_mode<synchronous>, transform_indices = @transform_3, window_bounds = array<i64: 8, 16>}, {pipeline_mode = #tpu.pipeline_mode<synchronous>, transform_indices = @transform_4, window_bounds = array<i64: 8, 1>}, {transform_indices = @transform_5, window_bounds = array<i64: 1, 2, 128, 128>}, {transform_indices = @transform_6, window_bounds = array<i64: 1, 1, 128>}, {transform_indices = @transform_7, window_bounds = array<i64: 1, 1, 128>}, {transform_indices = @transform_8, window_bounds = array<i64: 1, 1, 128>}, {pipeline_mode = #tpu.pipeline_mode<synchronous>, transform_indices = @transform_9, window_bounds = array<i64: 2, 128, 128>}, {pipeline_mode = #tpu.pipeline_mode<synchronous>, transform_indices = @transform_10, window_bounds = array<i64: 2, 1, 128>}, {pipeline_mode = #tpu.pipeline_mode<synchronous>, transform_indices = @transform_11, window_bounds = array<i64: 8, 128>}]} {
    %c16_i32 = arith.constant 16 : i32
    %0 = arith.muli %arg2, %c16_i32 : i32
    %1 = tpu.assume_multiple %0, 16 : i32
    %c0_i32 = arith.constant 0 : i32
    %2 = arith.cmpi eq, %arg0, %c0_i32 : i32
    %c0_i32_0 = arith.constant 0 : i32
    %3 = arith.cmpi eq, %arg1, %c0_i32_0 : i32
    %4 = arith.andi %2, %3 : i1
    %c0_i32_1 = arith.constant 0 : i32
    %5 = arith.cmpi eq, %arg2, %c0_i32_1 : i32
    %6 = arith.andi %4, %5 : i1
    %7 = arith.extui %6 : i1 to i32
    %c0_i32_2 = arith.constant 0 : i32
    %8 = arith.cmpi ne, %7, %c0_i32_2 : i32
    scf.if %8 {
      %c0 = arith.constant 0 : index
      %c0_6 = arith.constant 0 : index
      %15 = vector.load %arg3[%c0, %c0_6] : memref<16x128xbf16, #tpu.memory_space<vmem>>, vector<16x128xbf16>
      %c0_7 = arith.constant 0 : index
      %c0_8 = arith.constant 0 : index
      %16 = vector.load %arg15[%c0_7, %c0_8] : memref<16x128xbf16, #tpu.memory_space<vmem>>, vector<16x128xbf16>
      tpu.vector_store %arg15[%c0_7, %c0_8], %15 {strides = array<i32>} : memref<16x128xbf16, #tpu.memory_space<vmem>>, vector<16x128xbf16>,
    } else {
    }
    %c0_i32_3 = arith.constant 0 : i32
    %9 = arith.cmpi eq, %arg1, %c0_i32_3 : i32
    %10 = arith.extui %9 : i1 to i32
    %c0_i32_4 = arith.constant 0 : i32
    %11 = arith.cmpi ne, %10, %c0_i32_4 : i32
    scf.if %11 {
      %c0_i32_6 = arith.constant 0 : i32
      %15 = arith.cmpi eq, %arg2, %c0_i32_6 : i32
      %16 = arith.extui %15 : i1 to i32
      %c0_i32_7 = arith.constant 0 : i32
      %17 = arith.cmpi ne, %16, %c0_i32_7 : i32
      scf.if %17 {
        %cst_39 = arith.constant 0.000000e+00 : f32
        %60 = vector.broadcast %cst_39 : f32 to vector<1x128xf32>
        %c0_40 = arith.constant 0 : index
        %c0_41 = arith.constant 0 : index
        %61 = vector.load %arg17[%c0_40, %c0_41] : memref<1x128xf32, #tpu.memory_space<vmem>>, vector<1x128xf32>
        tpu.vector_store %arg17[%c0_40, %c0_41], %60 {strides = array<i32>} : memref<1x128xf32, #tpu.memory_space<vmem>>, vector<1x128xf32>,
        %cst_42 = arith.constant 0.000000e+00 : f32
        %62 = vector.broadcast %cst_42 : f32 to vector<1x128xf32>
        %c0_43 = arith.constant 0 : index
        %c0_44 = arith.constant 0 : index
        %63 = vector.load %arg18[%c0_43, %c0_44] : memref<1x128xf32, #tpu.memory_space<vmem>>, vector<1x128xf32>
        tpu.vector_store %arg18[%c0_43, %c0_44], %62 {strides = array<i32>} : memref<1x128xf32, #tpu.memory_space<vmem>>, vector<1x128xf32>,
      } else {
      }
      %c0 = arith.constant 0 : index
      %c0_8 = arith.constant 0 : index
      %18 = vector.load %arg15[%c0, %c0_8] : memref<16x128xbf16, #tpu.memory_space<vmem>>, vector<16x128xbf16>
      %c0_9 = arith.constant 0 : index
      %c0_10 = arith.constant 0 : index
      %19 = vector.load %arg4[%c0_9, %c0_10] : memref<16x16xbf16, #tpu.memory_space<vmem>>, vector<16x16xbf16>
      %cst = arith.constant dense<0.000000e+00> : vector<16x128xf32>
      %20 = tpu.matmul %19, %18, %cst {dimension_numbers = #tpu.dot_dimension_numbers<[1], [0], [0], [1], [0, 0, 1, 1], [], []>} : vector<16x16xbf16>, vector<16x128xbf16>, vector<16x128xf32> -> vector<16x128xf32>
      %c0_11 = arith.constant 0 : index
      %c0_12 = arith.constant 0 : index
      %21 = vector.load %arg5[%c0_11, %c0_12] : memref<16x1xf32, #tpu.memory_space<vmem>>, vector<16x1xf32>
      %22 = vector.broadcast %21 : vector<16x1xf32> to vector<16x128xf32>
      %23 = arith.mulf %20, %22 : vector<16x128xf32>
      %24 = arith.index_cast %1 : i32 to index
      %c0_13 = arith.constant 0 : index
      %25 = vector.load %arg15[%24, %c0_13] : memref<16x128xbf16, #tpu.memory_space<vmem>>, vector<16x128xbf16>
      %26 = arith.truncf %23 : vector<16x128xf32> to vector<16x128xbf16>
      %c0_14 = arith.constant 0 : index
      %c0_15 = arith.constant 0 : index
      %c0_16 = arith.constant 0 : index
      %c0_17 = arith.constant 0 : index
      %27 = vector.load %arg8[%c0_14, %c0_15, %c0_16, %c0_17] : memref<1x2x128x128xbf16, #tpu.memory_space<vmem>>, vector<1x1x128x128xbf16>
      %28 = vector.shape_cast %27 : vector<1x1x128x128xbf16> to vector<128x128xbf16>
      %cst_18 = arith.constant dense<0.000000e+00> : vector<16x128xf32>
      %29 = tpu.matmul %26, %28, %cst_18 {dimension_numbers = #tpu.dot_dimension_numbers<[1], [0], [0], [1], [0, 0, 1, 1], [], []>} : vector<16x128xbf16>, vector<128x128xbf16>, vector<16x128xf32> -> vector<16x128xf32>
      %c0_19 = arith.constant 0 : index
      %c1 = arith.constant 1 : index
      %c0_20 = arith.constant 0 : index
      %c0_21 = arith.constant 0 : index
      %30 = vector.load %arg8[%c0_19, %c1, %c0_20, %c0_21] : memref<1x2x128x128xbf16, #tpu.memory_space<vmem>>, vector<1x1x128x128xbf16>
      %31 = vector.shape_cast %30 : vector<1x1x128x128xbf16> to vector<128x128xbf16>
      %cst_22 = arith.constant dense<0.000000e+00> : vector<16x128xf32>
      %32 = tpu.matmul %25, %31, %cst_22 {dimension_numbers = #tpu.dot_dimension_numbers<[1], [0], [0], [1], [0, 0, 1, 1], [], []>} : vector<16x128xbf16>, vector<128x128xbf16>, vector<16x128xf32> -> vector<16x128xf32>
      %33 = arith.addf %29, %32 : vector<16x128xf32>
      %c0_23 = arith.constant 0 : index
      %c0_24 = arith.constant 0 : index
      %c0_25 = arith.constant 0 : index
      %34 = vector.load %arg9[%c0_23, %c0_24, %c0_25] : memref<1x1x128xf32, #tpu.memory_space<vmem>>, vector<1x1x128xf32>
      %35 = vector.shape_cast %34 : vector<1x1x128xf32> to vector<1x128xf32>
      %36 = vector.broadcast %35 : vector<1x128xf32> to vector<16x128xf32>
      %37 = arith.addf %33, %36 : vector<16x128xf32>
      %38 = arith.index_cast %1 : i32 to index
      %c0_26 = arith.constant 0 : index
      %39 = vector.load %arg16[%38, %c0_26] : memref<16x128xf32, #tpu.memory_space<vmem>>, vector<16x128xf32>
      tpu.vector_store %arg16[%38, %c0_26], %37 {strides = array<i32>} : memref<16x128xf32, #tpu.memory_space<vmem>>, vector<16x128xf32>,
      %40 = tpu.iota {dimensions = array<i32: 0>} : vector<16x1xi32>
      %41 = vector.broadcast %1 : i32 to vector<16x1xi32>
      %42 = arith.addi %40, %41 : vector<16x1xi32>
      %c16_i32_27 = arith.constant 16 : i32
      %43 = vector.broadcast %c16_i32_27 : i32 to vector<16x1xi32>
      %44 = arith.cmpi slt, %42, %43 : vector<16x1xi32>
      %cst_28 = arith.constant 0.000000e+00 : f32
      %45 = vector.shape_cast %44 : vector<16x1xi1> to vector<16x1xi1>
      %46 = vector.broadcast %45 : vector<16x1xi1> to vector<16x128xi1>
      %47 = vector.broadcast %cst_28 : f32 to vector<16x128xf32>
      %48 = arith.select %46, %37, %47 : vector<16x128xi1>, vector<16x128xf32>
      %c0_29 = arith.constant 0 : index
      %c0_30 = arith.constant 0 : index
      %49 = vector.load %arg17[%c0_29, %c0_30] : memref<1x128xf32, #tpu.memory_space<vmem>>, vector<1x128xf32>
      %cst_31 = arith.constant dense<0.000000e+00> : vector<128xf32>
      %50 = vector.multi_reduction <add>, %48, %cst_31 [0] : vector<16x128xf32> to vector<128xf32>
      %51 = vector.shape_cast %50 : vector<128xf32> to vector<1x128xf32>
      %52 = arith.addf %49, %51 : vector<1x128xf32>
      %c0_32 = arith.constant 0 : index
      %c0_33 = arith.constant 0 : index
      %53 = vector.load %arg17[%c0_32, %c0_33] : memref<1x128xf32, #tpu.memory_space<vmem>>, vector<1x128xf32>
      tpu.vector_store %arg17[%c0_32, %c0_33], %52 {strides = array<i32>} : memref<1x128xf32, #tpu.memory_space<vmem>>, vector<1x128xf32>,
      %c0_34 = arith.constant 0 : index
      %c0_35 = arith.constant 0 : index
      %54 = vector.load %arg18[%c0_34, %c0_35] : memref<1x128xf32, #tpu.memory_space<vmem>>, vector<1x128xf32>
      %55 = arith.mulf %48, %37 : vector<16x128xf32>
      %cst_36 = arith.constant dense<0.000000e+00> : vector<128xf32>
      %56 = vector.multi_reduction <add>, %55, %cst_36 [0] : vector<16x128xf32> to vector<128xf32>
      %57 = vector.shape_cast %56 : vector<128xf32> to vector<1x128xf32>
      %58 = arith.addf %54, %57 : vector<1x128xf32>
      %c0_37 = arith.constant 0 : index
      %c0_38 = arith.constant 0 : index
      %59 = vector.load %arg18[%c0_37, %c0_38] : memref<1x128xf32, #tpu.memory_space<vmem>>, vector<1x128xf32>
      tpu.vector_store %arg18[%c0_37, %c0_38], %58 {strides = array<i32>} : memref<1x128xf32, #tpu.memory_space<vmem>>, vector<1x128xf32>,
    } else {
    }
    %c1_i32 = arith.constant 1 : i32
    %12 = arith.cmpi eq, %arg1, %c1_i32 : i32
    %13 = arith.extui %12 : i1 to i32
    %c0_i32_5 = arith.constant 0 : i32
    %14 = arith.cmpi ne, %13, %c0_i32_5 : i32
    scf.if %14 {
      %c0 = arith.constant 0 : index
      %c0_6 = arith.constant 0 : index
      %15 = vector.load %arg17[%c0, %c0_6] : memref<1x128xf32, #tpu.memory_space<vmem>>, vector<1x128xf32>
      %cst = arith.constant 6.250000e-02 : f32
      %16 = vector.broadcast %cst : f32 to vector<1x128xf32>
      %17 = arith.mulf %15, %16 : vector<1x128xf32>
      %c0_7 = arith.constant 0 : index
      %c0_8 = arith.constant 0 : index
      %18 = vector.load %arg18[%c0_7, %c0_8] : memref<1x128xf32, #tpu.memory_space<vmem>>, vector<1x128xf32>
      %cst_9 = arith.constant 6.250000e-02 : f32
      %19 = vector.broadcast %cst_9 : f32 to vector<1x128xf32>
      %20 = arith.mulf %18, %19 : vector<1x128xf32>
      %21 = arith.mulf %17, %17 : vector<1x128xf32>
      %22 = arith.subf %20, %21 : vector<1x128xf32>
      %cst_10 = arith.constant 0.000000e+00 : f32
      %23 = vector.broadcast %cst_10 : f32 to vector<1x128xf32>
      %24 = arith.maximumf %22, %23 : vector<1x128xf32>
      %cst_11 = arith.constant 9.99999974E-6 : f32
      %25 = vector.broadcast %cst_11 : f32 to vector<1x128xf32>
      %26 = arith.addf %24, %25 : vector<1x128xf32>
      %27 = math.rsqrt %26 : vector<1x128xf32>
      %28 = arith.index_cast %1 : i32 to index
      %c0_12 = arith.constant 0 : index
      %29 = vector.load %arg16[%28, %c0_12] : memref<16x128xf32, #tpu.memory_space<vmem>>, vector<16x128xf32>
      %30 = vector.broadcast %17 : vector<1x128xf32> to vector<16x128xf32>
      %31 = arith.subf %29, %30 : vector<16x128xf32>
      %32 = vector.broadcast %27 : vector<1x128xf32> to vector<16x128xf32>
      %33 = arith.mulf %31, %32 : vector<16x128xf32>
      %c0_13 = arith.constant 0 : index
      %c0_14 = arith.constant 0 : index
      %c0_15 = arith.constant 0 : index
      %34 = vector.load %arg10[%c0_13, %c0_14, %c0_15] : memref<1x1x128xf32, #tpu.memory_space<vmem>>, vector<1x1x128xf32>
      %35 = vector.shape_cast %34 : vector<1x1x128xf32> to vector<1x128xf32>
      %36 = vector.broadcast %35 : vector<1x128xf32> to vector<16x128xf32>
      %37 = arith.mulf %33, %36 : vector<16x128xf32>
      %c0_16 = arith.constant 0 : index
      %c0_17 = arith.constant 0 : index
      %c0_18 = arith.constant 0 : index
      %38 = vector.load %arg11[%c0_16, %c0_17, %c0_18] : memref<1x1x128xf32, #tpu.memory_space<vmem>>, vector<1x1x128xf32>
      %39 = vector.shape_cast %38 : vector<1x1x128xf32> to vector<1x128xf32>
      %40 = vector.broadcast %39 : vector<1x128xf32> to vector<16x128xf32>
      %41 = arith.addf %37, %40 : vector<16x128xf32>
      %cst_19 = arith.constant 0.000000e+00 : f32
      %42 = vector.broadcast %cst_19 : f32 to vector<16x128xf32>
      %43 = arith.maximumf %41, %42 : vector<16x128xf32>
      %44 = arith.truncf %43 : vector<16x128xf32> to vector<16x128xbf16>
      %45 = arith.index_cast %1 : i32 to index
      %c0_20 = arith.constant 0 : index
      %46 = vector.load %arg15[%45, %c0_20] : memref<16x128xbf16, #tpu.memory_space<vmem>>, vector<16x128xbf16>
      tpu.vector_store %arg15[%45, %c0_20], %44 {strides = array<i32>} : memref<16x128xbf16, #tpu.memory_space<vmem>>, vector<16x128xbf16>,
      %c1_i32_21 = arith.constant 1 : i32
      %47 = arith.cmpi eq, %arg0, %c1_i32_21 : i32
      %c0_i32_22 = arith.constant 0 : i32
      %48 = arith.cmpi eq, %arg2, %c0_i32_22 : i32
      %49 = arith.andi %47, %48 : i1
      %50 = arith.extui %49 : i1 to i32
      %c0_i32_23 = arith.constant 0 : i32
      %51 = arith.cmpi ne, %50, %c0_i32_23 : i32
      scf.if %51 {
        %c0_24 = arith.constant 0 : index
        %c0_25 = arith.constant 0 : index
        %52 = vector.load %arg6[%c0_24, %c0_25] : memref<8x16xbf16, #tpu.memory_space<vmem>>, vector<8x16xbf16>
        %c0_26 = arith.constant 0 : index
        %c0_27 = arith.constant 0 : index
        %53 = vector.load %arg15[%c0_26, %c0_27] : memref<16x128xbf16, #tpu.memory_space<vmem>>, vector<16x128xbf16>
        %cst_28 = arith.constant dense<0.000000e+00> : vector<8x128xf32>
        %54 = tpu.matmul %52, %53, %cst_28 {dimension_numbers = #tpu.dot_dimension_numbers<[1], [0], [0], [1], [0, 0, 1, 1], [], []>} : vector<8x16xbf16>, vector<16x128xbf16>, vector<8x128xf32> -> vector<8x128xf32>
        %c0_29 = arith.constant 0 : index
        %c0_30 = arith.constant 0 : index
        %55 = vector.load %arg7[%c0_29, %c0_30] : memref<8x1xf32, #tpu.memory_space<vmem>>, vector<8x1xf32>
        %56 = vector.broadcast %55 : vector<8x1xf32> to vector<8x128xf32>
        %57 = arith.mulf %54, %56 : vector<8x128xf32>
        %58 = arith.truncf %57 : vector<8x128xf32> to vector<8x128xbf16>
        %c0_31 = arith.constant 0 : index
        %c0_32 = arith.constant 0 : index
        %c0_33 = arith.constant 0 : index
        %59 = vector.load %arg12[%c0_31, %c0_32, %c0_33] : memref<2x128x128xbf16, #tpu.memory_space<vmem>>, vector<1x128x128xbf16>
        %60 = vector.shape_cast %59 : vector<1x128x128xbf16> to vector<128x128xbf16>
        %cst_34 = arith.constant dense<0.000000e+00> : vector<8x128xf32>
        %61 = tpu.matmul %58, %60, %cst_34 {dimension_numbers = #tpu.dot_dimension_numbers<[1], [0], [0], [1], [0, 0, 1, 1], [], []>} : vector<8x128xbf16>, vector<128x128xbf16>, vector<8x128xf32> -> vector<8x128xf32>
        %c0_35 = arith.constant 0 : index
        %c0_36 = arith.constant 0 : index
        %c0_37 = arith.constant 0 : index
        %62 = vector.load %arg13[%c0_35, %c0_36, %c0_37] : memref<2x1x128xf32, #tpu.memory_space<vmem>>, vector<1x1x128xf32>
        %63 = vector.shape_cast %62 : vector<1x1x128xf32> to vector<1x128xf32>
        %64 = vector.broadcast %63 : vector<1x128xf32> to vector<8x128xf32>
        %65 = arith.addf %61, %64 : vector<8x128xf32>
        %cst_38 = arith.constant 0.000000e+00 : f32
        %66 = vector.broadcast %cst_38 : f32 to vector<8x128xf32>
        %67 = arith.maximumf %65, %66 : vector<8x128xf32>
        %68 = arith.truncf %67 : vector<8x128xf32> to vector<8x128xbf16>
        %c1 = arith.constant 1 : index
        %c0_39 = arith.constant 0 : index
        %c0_40 = arith.constant 0 : index
        %69 = vector.load %arg12[%c1, %c0_39, %c0_40] : memref<2x128x128xbf16, #tpu.memory_space<vmem>>, vector<1x128x128xbf16>
        %70 = vector.shape_cast %69 : vector<1x128x128xbf16> to vector<128x128xbf16>
        %cst_41 = arith.constant dense<0.000000e+00> : vector<8x128xf32>
        %71 = tpu.matmul %68, %70, %cst_41 {dimension_numbers = #tpu.dot_dimension_numbers<[1], [0], [0], [1], [0, 0, 1, 1], [], []>} : vector<8x128xbf16>, vector<128x128xbf16>, vector<8x128xf32> -> vector<8x128xf32>
        %c1_42 = arith.constant 1 : index
        %c0_43 = arith.constant 0 : index
        %c0_44 = arith.constant 0 : index
        %72 = vector.load %arg13[%c1_42, %c0_43, %c0_44] : memref<2x1x128xf32, #tpu.memory_space<vmem>>, vector<1x1x128xf32>
        %73 = vector.shape_cast %72 : vector<1x1x128xf32> to vector<1x128xf32>
        %74 = vector.broadcast %73 : vector<1x128xf32> to vector<8x128xf32>
        %75 = arith.addf %71, %74 : vector<8x128xf32>
        %c0_45 = arith.constant 0 : index
        %c0_46 = arith.constant 0 : index
        %76 = vector.load %arg14[%c0_45, %c0_46] : memref<8x128xf32, #tpu.memory_space<vmem>>, vector<8x128xf32>
        tpu.vector_store %arg14[%c0_45, %c0_46], %75 {strides = array<i32>} : memref<8x128xf32, #tpu.memory_space<vmem>>, vector<8x128xf32>,
      } else {
      }
    } else {
    }
    return
  }
  func.func @transform_0(%arg0: i32, %arg1: i32, %arg2: i32) -> (i32, i32) {
    %c0_i32 = arith.constant 0 : i32
    %c0_i32_0 = arith.constant 0 : i32
    %c0_i32_1 = arith.constant 0 : i32
    return %c0_i32, %c0_i32_0 : i32, i32
  }
  func.func @transform_1(%arg0: i32, %arg1: i32, %arg2: i32) -> (i32, i32) {
    %c1_i32 = arith.constant 1 : i32
    %0 = arith.subi %c1_i32, %arg1 : i32
    %1 = arith.muli %arg2, %0 : i32
    %c0_i32 = arith.constant 0 : i32
    %2 = arith.muli %c0_i32, %arg1 : i32
    %3 = arith.addi %1, %2 : i32
    %c0_i32_0 = arith.constant 0 : i32
    %c0_i32_1 = arith.constant 0 : i32
    return %3, %c0_i32_0 : i32, i32
  }
  func.func @transform_2(%arg0: i32, %arg1: i32, %arg2: i32) -> (i32, i32) {
    %c0_i32 = arith.constant 0 : i32
    %c0_i32_0 = arith.constant 0 : i32
    return %arg2, %c0_i32 : i32, i32
  }
  func.func @transform_3(%arg0: i32, %arg1: i32, %arg2: i32) -> (i32, i32) {
    %c0_i32 = arith.constant 0 : i32
    %c0_i32_0 = arith.constant 0 : i32
    %c0_i32_1 = arith.constant 0 : i32
    return %c0_i32, %c0_i32_0 : i32, i32
  }
  func.func @transform_4(%arg0: i32, %arg1: i32, %arg2: i32) -> (i32, i32) {
    %c0_i32 = arith.constant 0 : i32
    %c0_i32_0 = arith.constant 0 : i32
    %c0_i32_1 = arith.constant 0 : i32
    return %c0_i32, %c0_i32_0 : i32, i32
  }
  func.func @transform_5(%arg0: i32, %arg1: i32, %arg2: i32) -> (i32, i32, i32, i32) {
    %c0_i32 = arith.constant 0 : i32
    %c0_i32_0 = arith.constant 0 : i32
    %c0_i32_1 = arith.constant 0 : i32
    %c0_i32_2 = arith.constant 0 : i32
    return %arg0, %c0_i32, %c0_i32_0, %c0_i32_1 : i32, i32, i32, i32
  }
  func.func @transform_6(%arg0: i32, %arg1: i32, %arg2: i32) -> (i32, i32, i32) {
    %c0_i32 = arith.constant 0 : i32
    %c0_i32_0 = arith.constant 0 : i32
    %c0_i32_1 = arith.constant 0 : i32
    return %arg0, %c0_i32, %c0_i32_0 : i32, i32, i32
  }
  func.func @transform_7(%arg0: i32, %arg1: i32, %arg2: i32) -> (i32, i32, i32) {
    %c0_i32 = arith.constant 0 : i32
    %c0_i32_0 = arith.constant 0 : i32
    %c0_i32_1 = arith.constant 0 : i32
    return %arg0, %c0_i32, %c0_i32_0 : i32, i32, i32
  }
  func.func @transform_8(%arg0: i32, %arg1: i32, %arg2: i32) -> (i32, i32, i32) {
    %c0_i32 = arith.constant 0 : i32
    %c0_i32_0 = arith.constant 0 : i32
    %c0_i32_1 = arith.constant 0 : i32
    return %arg0, %c0_i32, %c0_i32_0 : i32, i32, i32
  }
  func.func @transform_9(%arg0: i32, %arg1: i32, %arg2: i32) -> (i32, i32, i32) {
    %c0_i32 = arith.constant 0 : i32
    %c0_i32_0 = arith.constant 0 : i32
    %c0_i32_1 = arith.constant 0 : i32
    %c0_i32_2 = arith.constant 0 : i32
    return %c0_i32, %c0_i32_0, %c0_i32_1 : i32, i32, i32
  }
  func.func @transform_10(%arg0: i32, %arg1: i32, %arg2: i32) -> (i32, i32, i32) {
    %c0_i32 = arith.constant 0 : i32
    %c0_i32_0 = arith.constant 0 : i32
    %c0_i32_1 = arith.constant 0 : i32
    %c0_i32_2 = arith.constant 0 : i32
    return %c0_i32, %c0_i32_0, %c0_i32_1 : i32, i32, i32
  }
  func.func @transform_11(%arg0: i32, %arg1: i32, %arg2: i32) -> (i32, i32) {
    %c0_i32 = arith.constant 0 : i32
    %c0_i32_0 = arith.constant 0 : i32
    %c0_i32_1 = arith.constant 0 : i32
    return %c0_i32, %c0_i32_0 : i32, i32
  }
}

</mosaic_0001>

<llo_original>
// kernel: tpu_custom_call.1
$region0: #{tpu_custom_call.1}
  #allocation0 [shape = 'u32[]', space=smem, size = 0x4, offset = 0x4, fixed_abs, tag = 'smem constant byte address 0x4 - core index']
  #allocation1 [shape = 'u32[144,128]{1,0:T(1,128)}', space=vmem, size = 0x12000, scoped, tag = 'internal scratch']
  #allocation2 [shape = 'bf16[16,128]{1,0:T(16,128)(2,1)}', space=vmem, size = 0x1000, scoped, tag = 'scratch operand']
  #allocation3 [shape = 'f32[16,128]{1,0:T(8,128)}', space=vmem, size = 0x2000, scoped, tag = 'scratch operand']
  #allocation4 [shape = 'f32[1,128]{1,0:T(1,128)}', space=vmem, size = 0x200, scoped, tag = 'scratch operand']
  #allocation5 [shape = 'f32[1,128]{1,0:T(1,128)}', space=vmem, size = 0x200, scoped, tag = 'scratch operand']
  %s0 = inlined_call_operand.vmem [shape: bf16[16,128], index: 0, kind: input, shape index: {}]
  %s1 = inlined_call_operand.vmem [shape: bf16[16,16], index: 1, kind: input, shape index: {}]
  %s2 = inlined_call_operand.vmem [shape: f32[16,1], index: 2, kind: input, shape index: {}]
  %s3 = inlined_call_operand.vmem [shape: bf16[8,16], index: 3, kind: input, shape index: {}]
  %s4 = inlined_call_operand.vmem [shape: f32[8,1], index: 4, kind: input, shape index: {}]
  %s5 = inlined_call_operand.hbm [shape: bf16[2,2,128,128], index: 5, kind: input, shape index: {}]
  %s6 = inlined_call_operand.vmem [shape: f32[2,1,128], index: 6, kind: input, shape index: {}]
  %s7 = inlined_call_operand.vmem [shape: f32[2,1,128], index: 7, kind: input, shape index: {}]
  %s8 = inlined_call_operand.vmem [shape: f32[2,1,128], index: 8, kind: input, shape index: {}]
  %s9 = inlined_call_operand.hbm [shape: bf16[2,128,128], index: 9, kind: input, shape index: {}]
  %s10 = inlined_call_operand.vmem [shape: f32[2,1,128], index: 10, kind: input, shape index: {}]
  %s11 = inlined_call_operand.hbm [shape: f32[8,128], index: 11, kind: output, shape index: {}]
  %s12 = sld [smem:[#allocation0]]
  $region105: #{tpu_custom_call.1} parent=0
    _
  %s14 = ssub.s32 1, %s12
  %s15 = scalar_select 0, %s14, %s12
  $region1: #{tpu_custom_call.1} parent=0
    #allocation6 [shape = 'u8[131072]{0}', space=vmem, size = 0x20000, scoped, tag = 'input window, operand 5']
    #allocation7 [shape = 's32[2]{0}', space=sflag, size = 0x8, scoped, tag = 'scoped memory for tpu_custom_call.1']
    #allocation8 [shape = 's32[2]{0}', space=sflag, size = 0x8, scoped, tag = 'scoped memory for tpu_custom_call.1']
    #allocation9 [shape = 'u8[65536]{0}', space=vmem, size = 0x10000, scoped, tag = 'input window, operand 9, single buffered']
    #allocation10 [shape = 's32[1]{0}', space=sflag, size = 0x4, scoped, tag = 'scoped memory for tpu_custom_call.1']
    #allocation11 [shape = 'u8[4096]{0}', space=vmem, size = 0x1000, scoped, tag = 'output window, operand 0, single buffered']
    %16 = vsyncpa [#allocation7], 0
    %s17 = scalar_lea.sflag [#allocation7], 1
    %18 = vsyncpa %s17, 0
    %19 = vsyncpa [#allocation10], 0
    %20 = vsyncpa [#allocation8], 0
    loop: start=0, step=1, limit=6
    $region2: #{tpu_custom_call.1} parent=1 // loop_pre_header
      _
    $region3: #{tpu_custom_call.1} parent=1 // loop_header
      %s22 = sphi 0, %s26
      %p23 = scmp.ge.s32.totalorder %s22, 6
      %s29 = sphi 0, %s48
      %s30 = sphi 0, %s44
      %s31 = sphi 0, %s40
      %s32 = sphi 0, %s29
      %s33 = sphi 0, %s30
      %s34 = sphi 0, %s31
      %s35 = sphi 0, %s32
      %s36 = sphi 0, %s33
      %s37 = sphi 0, %s34
      %s49 = sphi 0, %s49
      %s51 = sphi 0, %s49
      %s52 = sphi 0, %s51
      %s66 = sphi 0, %s52
      %s76 = sphi 0, %s78
      %s79 = sphi 0, %s76
      %s80 = sphi 0, %s79
      %s96 = sphi 0, %s80
      %s102 = sphi 0, %s104
      %s105 = sphi 0, %s102
      %s106 = sphi 0, %s105
      %s122 = sphi 0, %s106
      %s126 = sphi 0, %s126
      %s128 = sphi 0, %s126
      %s129 = sphi 0, %s128
      %s143 = sphi 0, %s129
      %s147 = sphi 0, %s147
      %s149 = sphi 0, %s147
      %s150 = sphi 0, %s149
      %s164 = sphi 0, %s150
      %s170 = sphi 0, %s172
      %s173 = sphi 0, %s170
      %s174 = sphi 0, %s173
      %s190 = sphi 0, %s174
      %s196 = sphi 0, %s198
      %s199 = sphi 0, %s196
      %s200 = sphi 0, %s199
      %s216 = sphi 0, %s200
      %s222 = sphi 0, %s224
      %s225 = sphi 0, %s222
      %s226 = sphi 0, %s225
      %s242 = sphi 0, %s226
      %s248 = sphi 0, %s250
      %s251 = sphi 0, %s248
      %s252 = sphi 0, %s251
      %s268 = sphi 0, %s252
      %s272 = sphi 0, %s272
      %s274 = sphi 0, %s272
      %s275 = sphi 0, %s274
      %s289 = sphi 0, %s275
      %s293 = sphi 0, %s293
      %s295 = sphi 0, %s293
      %s296 = sphi 0, %s295
      %s310 = sphi 0, %s296
      %s314 = sphi 0, %s314
      %s316 = sphi 0, %s314
      %s317 = sphi 0, %s316
      %s331 = sphi 0, %s317
    $region4: #{tpu_custom_call.1} parent=1 // loop_header_branch
      %25 = sbr.rel (%p23) target = $region8
    $region5: #{tpu_custom_call.1} parent=1 // loop_body
      %s27 = ssub.s32 %s22, 1
      %s28 = ssub.s32 %s22, 2
      %s38 = sadd.s32 1, %s31
      %p39 = scmp.ge.s32.totalorder %s38, 1
      %s40 = scalar_select %p39, 0, %s38
      %s41 = sadd.s32 1, %s30
      %s42 = scalar_select %p39, %s41, %s30
      %p43 = scmp.ge.s32.totalorder %s42, 2
      %s44 = scalar_select %p43, 0, %s42
      %s45 = sadd.s32 1, %s29
      %s46 = scalar_select %p43, %s45, %s29
      %p47 = scmp.ge.s32.totalorder %s46, 2
      %s48 = scalar_select %p47, 0, %s46
      %s50 = sadd.s32 %s49, 1
      %p53 = scmp.eq.s32.totalorder %s22, 3
      %p54 = scmp.ne.s32.totalorder %s49, %s51
      %p55 = scmp.eq.s32.totalorder %s22, 0
      %p56 = por %p54, %p55
      %p57 = scmp.ne.s32.totalorder %s49, %s51
      %p58 = scmp.eq.s32.totalorder %s27, 3
      %p59 = por %p57, %p58
      %p60 = scmp.ne.s32.totalorder %s51, %s52
      %p61 = scmp.eq.s32.totalorder %s27, 0
      %p62 = por %p60, %p61
      %p63 = scmp.ne.s32.totalorder %s51, %s52
      %p64 = scmp.eq.s32.totalorder %s28, 3
      %p65 = por %p63, %p64
      %p67 = scmp.ne.s32.totalorder %s52, %s66
      %p68 = scmp.eq.s32.totalorder %s28, 0
      %p69 = por %p67, %p68
      %s70 = ssub.s32 1, %s30
      %s71 = smul.u32 %s31, %s70
      %s72 = ssub.s32 1, %s44
      %s73 = smul.u32 %s40, %s72
      %s74 = ssub.s32 %s71, %s73
      %p75 = scmp.eq.s32.totalorder %s74, 0
      %s77 = sadd.s32 %s76, 1
      %s78 = scalar_select %p75, %s76, %s77
      %p81 = pneg %p75
      %p82 = scmp.eq.s32.totalorder %s22, 3
      %p83 = por %p81, %p82
      %p84 = scmp.ne.s32.totalorder %s76, %s79
      %p85 = scmp.eq.s32.totalorder %s22, 0
      %p86 = por %p84, %p85
      %p87 = scmp.ne.s32.totalorder %s76, %s79
      %p88 = scmp.eq.s32.totalorder %s27, 3
      %p89 = por %p87, %p88
      %p90 = scmp.ne.s32.totalorder %s79, %s80
      %p91 = scmp.eq.s32.totalorder %s27, 0
      %p92 = por %p90, %p91
      %p93 = scmp.ne.s32.totalorder %s79, %s80
      %p94 = scmp.eq.s32.totalorder %s28, 3
      %p95 = por %p93, %p94
      %p97 = scmp.ne.s32.totalorder %s80, %s96
      %p98 = scmp.eq.s32.totalorder %s28, 0
      %p99 = por %p97, %p98
      %s100 = ssub.s32 %s31, %s40
      %p101 = scmp.eq.s32.totalorder %s100, 0
      %s103 = sadd.s32 %s102, 1
      %s104 = scalar_select %p101, %s102, %s103
      %p107 = pneg %p101
      %p108 = scmp.eq.s32.totalorder %s22, 3
      %p109 = por %p107, %p108
      %p110 = scmp.ne.s32.totalorder %s102, %s105
      %p111 = scmp.eq.s32.totalorder %s22, 0
      %p112 = por %p110, %p111
      %p113 = scmp.ne.s32.totalorder %s102, %s105
      %p114 = scmp.eq.s32.totalorder %s27, 3
      %p115 = por %p113, %p114
      %p116 = scmp.ne.s32.totalorder %s105, %s106
      %p117 = scmp.eq.s32.totalorder %s27, 0
      %p118 = por %p116, %p117
      %p119 = scmp.ne.s32.totalorder %s105, %s106
      %p120 = scmp.eq.s32.totalorder %s28, 3
      %p121 = por %p119, %p120
      %p123 = scmp.ne.s32.totalorder %s106, %s122
      %p124 = scmp.eq.s32.totalorder %s28, 0
      %p125 = por %p123, %p124
      %s127 = sadd.s32 %s126, 1
      %p130 = scmp.eq.s32.totalorder %s22, 3
      %p131 = scmp.ne.s32.totalorder %s126, %s128
      %p132 = scmp.eq.s32.totalorder %s22, 0
      %p133 = por %p131, %p132
      %p134 = scmp.ne.s32.totalorder %s126, %s128
      %p135 = scmp.eq.s32.totalorder %s27, 3
      %p136 = por %p134, %p135
      %p137 = scmp.ne.s32.totalorder %s128, %s129
      %p138 = scmp.eq.s32.totalorder %s27, 0
      %p139 = por %p137, %p138
      %p140 = scmp.ne.s32.totalorder %s128, %s129
      %p141 = scmp.eq.s32.totalorder %s28, 3
      %p142 = por %p140, %p141
      %p144 = scmp.ne.s32.totalorder %s129, %s143
      %p145 = scmp.eq.s32.totalorder %s28, 0
      %p146 = por %p144, %p145
      %s148 = sadd.s32 %s147, 1
      %p151 = scmp.eq.s32.totalorder %s22, 3
      %p152 = scmp.ne.s32.totalorder %s147, %s149
      %p153 = scmp.eq.s32.totalorder %s22, 0
      %p154 = por %p152, %p153
      %p155 = scmp.ne.s32.totalorder %s147, %s149
      %p156 = scmp.eq.s32.totalorder %s27, 3
      %p157 = por %p155, %p156
      %p158 = scmp.ne.s32.totalorder %s149, %s150
      %p159 = scmp.eq.s32.totalorder %s27, 0
      %p160 = por %p158, %p159
      %p161 = scmp.ne.s32.totalorder %s149, %s150
      %p162 = scmp.eq.s32.totalorder %s28, 3
      %p163 = por %p161, %p162
      %p165 = scmp.ne.s32.totalorder %s150, %s164
      %p166 = scmp.eq.s32.totalorder %s28, 0
      %p167 = por %p165, %p166
      %s168 = ssub.s32 %s29, %s48
      %p169 = scmp.eq.s32.totalorder %s168, 0
      %s171 = sadd.s32 %s170, 1
      %s172 = scalar_select %p169, %s170, %s171
      %p175 = pneg %p169
      %p176 = scmp.eq.s32.totalorder %s22, 3
      %p177 = por %p175, %p176
      %p178 = scmp.ne.s32.totalorder %s170, %s173
      %p179 = scmp.eq.s32.totalorder %s22, 0
      %p180 = por %p178, %p179
      %p181 = scmp.ne.s32.totalorder %s170, %s173
      %p182 = scmp.eq.s32.totalorder %s27, 3
      %p183 = por %p181, %p182
      %p184 = scmp.ne.s32.totalorder %s173, %s174
      %p185 = scmp.eq.s32.totalorder %s27, 0
      %p186 = por %p184, %p185
      %p187 = scmp.ne.s32.totalorder %s173, %s174
      %p188 = scmp.eq.s32.totalorder %s28, 3
      %p189 = por %p187, %p188
      %p191 = scmp.ne.s32.totalorder %s174, %s190
      %p192 = scmp.eq.s32.totalorder %s28, 0
      %p193 = por %p191, %p192
      %s194 = ssub.s32 %s29, %s48
      %p195 = scmp.eq.s32.totalorder %s194, 0
      %s197 = sadd.s32 %s196, 1
      %s198 = scalar_select %p195, %s196, %s197
      %p201 = pneg %p195
      %p202 = scmp.eq.s32.totalorder %s22, 3
      %p203 = por %p201, %p202
      %p204 = scmp.ne.s32.totalorder %s196, %s199
      %p205 = scmp.eq.s32.totalorder %s22, 0
      %p206 = por %p204, %p205
      %p207 = scmp.ne.s32.totalorder %s196, %s199
      %p208 = scmp.eq.s32.totalorder %s27, 3
      %p209 = por %p207, %p208
      %p210 = scmp.ne.s32.totalorder %s199, %s200
      %p211 = scmp.eq.s32.totalorder %s27, 0
      %p212 = por %p210, %p211
      %p213 = scmp.ne.s32.totalorder %s199, %s200
      %p214 = scmp.eq.s32.totalorder %s28, 3
      %p215 = por %p213, %p214
      %p217 = scmp.ne.s32.totalorder %s200, %s216
      %p218 = scmp.eq.s32.totalorder %s28, 0
      %p219 = por %p217, %p218
      %s220 = ssub.s32 %s29, %s48
      %p221 = scmp.eq.s32.totalorder %s220, 0
      %s223 = sadd.s32 %s222, 1
      %s224 = scalar_select %p221, %s222, %s223
      %p227 = pneg %p221
      %p228 = scmp.eq.s32.totalorder %s22, 3
      %p229 = por %p227, %p228
      %p230 = scmp.ne.s32.totalorder %s222, %s225
      %p231 = scmp.eq.s32.totalorder %s22, 0
      %p232 = por %p230, %p231
      %p233 = scmp.ne.s32.totalorder %s222, %s225
      %p234 = scmp.eq.s32.totalorder %s27, 3
      %p235 = por %p233, %p234
      %p236 = scmp.ne.s32.totalorder %s225, %s226
      %p237 = scmp.eq.s32.totalorder %s27, 0
      %p238 = por %p236, %p237
      %p239 = scmp.ne.s32.totalorder %s225, %s226
      %p240 = scmp.eq.s32.totalorder %s28, 3
      %p241 = por %p239, %p240
      %p243 = scmp.ne.s32.totalorder %s226, %s242
      %p244 = scmp.eq.s32.totalorder %s28, 0
      %p245 = por %p243, %p244
      %s246 = ssub.s32 %s29, %s48
      %p247 = scmp.eq.s32.totalorder %s246, 0
      %s249 = sadd.s32 %s248, 1
      %s250 = scalar_select %p247, %s248, %s249
      %p253 = pneg %p247
      %p254 = scmp.eq.s32.totalorder %s22, 3
      %p255 = por %p253, %p254
      %p256 = scmp.ne.s32.totalorder %s248, %s251
      %p257 = scmp.eq.s32.totalorder %s22, 0
      %p258 = por %p256, %p257
      %p259 = scmp.ne.s32.totalorder %s248, %s251
      %p260 = scmp.eq.s32.totalorder %s27, 3
      %p261 = por %p259, %p260
      %p262 = scmp.ne.s32.totalorder %s251, %s252
      %p263 = scmp.eq.s32.totalorder %s27, 0
      %p264 = por %p262, %p263
      %p265 = scmp.ne.s32.totalorder %s251, %s252
      %p266 = scmp.eq.s32.totalorder %s28, 3
      %p267 = por %p265, %p266
      %p269 = scmp.ne.s32.totalorder %s252, %s268
      %p270 = scmp.eq.s32.totalorder %s28, 0
      %p271 = por %p269, %p270
      %s273 = sadd.s32 %s272, 1
      %p276 = scmp.eq.s32.totalorder %s22, 3
      %p277 = scmp.ne.s32.totalorder %s272, %s274
      %p278 = scmp.eq.s32.totalorder %s22, 0
      %p279 = por %p277, %p278
      %p280 = scmp.ne.s32.totalorder %s272, %s274
      %p281 = scmp.eq.s32.totalorder %s27, 3
      %p282 = por %p280, %p281
      %p283 = scmp.ne.s32.totalorder %s274, %s275
      %p284 = scmp.eq.s32.totalorder %s27, 0
      %p285 = por %p283, %p284
      %p286 = scmp.ne.s32.totalorder %s274, %s275
      %p287 = scmp.eq.s32.totalorder %s28, 3
      %p288 = por %p286, %p287
      %p290 = scmp.ne.s32.totalorder %s275, %s289
      %p291 = scmp.eq.s32.totalorder %s28, 0
      %p292 = por %p290, %p291
      %s294 = sadd.s32 %s293, 1
      %p297 = scmp.eq.s32.totalorder %s22, 3
      %p298 = scmp.ne.s32.totalorder %s293, %s295
      %p299 = scmp.eq.s32.totalorder %s22, 0
      %p300 = por %p298, %p299
      %p301 = scmp.ne.s32.totalorder %s293, %s295
      %p302 = scmp.eq.s32.totalorder %s27, 3
      %p303 = por %p301, %p302
      %p304 = scmp.ne.s32.totalorder %s295, %s296
      %p305 = scmp.eq.s32.totalorder %s27, 0
      %p306 = por %p304, %p305
      %p307 = scmp.ne.s32.totalorder %s295, %s296
      %p308 = scmp.eq.s32.totalorder %s28, 3
      %p309 = por %p307, %p308
      %p311 = scmp.ne.s32.totalorder %s296, %s310
      %p312 = scmp.eq.s32.totalorder %s28, 0
      %p313 = por %p311, %p312
      %s315 = sadd.s32 %s314, 1
      %p318 = scmp.eq.s32.totalorder %s22, 3
      %p319 = scmp.ne.s32.totalorder %s314, %s316
      %p320 = scmp.eq.s32.totalorder %s22, 0
      %p321 = por %p319, %p320
      %p322 = scmp.ne.s32.totalorder %s314, %s316
      %p323 = scmp.eq.s32.totalorder %s27, 3
      %p324 = por %p322, %p323
      %p325 = scmp.ne.s32.totalorder %s316, %s317
      %p326 = scmp.eq.s32.totalorder %s27, 0
      %p327 = por %p325, %p326
      %p328 = scmp.ne.s32.totalorder %s316, %s317
      %p329 = scmp.eq.s32.totalorder %s28, 3
      %p330 = por %p328, %p329
      %p332 = scmp.ne.s32.totalorder %s317, %s331
      %p333 = scmp.eq.s32.totalorder %s28, 0
      %p334 = por %p332, %p333
      %p335 = scmp.le.s32.totalorder 1, %s22
      %p336 = scmp.lt.s32.totalorder %s22, 5
      %p337 = pnand %p335, %p336
      %p338 = pneg %p337
      // Predicated region
      $region9: #{tpu_custom_call.1} parent=5 // pred_check
        _
      $region10: #{tpu_custom_call.1} parent=5 // pred_check_branch
        %340 = sbr.rel (%p337) target = $region12
      $region11: #{tpu_custom_call.1} parent=5 // pred_region
        %s341 = ssub.s32 %s22, 1
        // Predicated region
        $region13: #{tpu_custom_call.1} parent=11 // pred_check
          %p342 = pneg %p62
        $region14: #{tpu_custom_call.1} parent=11 // pred_check_branch
          %344 = sbr.rel (%p342) target = $region16
        $region15: #{tpu_custom_call.1} parent=11 // pred_region
          _
        $region16: #{tpu_custom_call.1} parent=11 // pred_fallthru
          _
        // Predicated region
        $region17: #{tpu_custom_call.1} parent=11 // pred_check
          %p345 = pneg %p118
        $region18: #{tpu_custom_call.1} parent=11 // pred_check_branch
          %347 = sbr.rel (%p345) target = $region20
        $region19: #{tpu_custom_call.1} parent=11 // pred_region
          %s348 = smul.u32 2, %s34
          %p349 = scmp.lt.s32.totalorder %s348, 1
          %s350 = scalar_select %p349, %s348, 1
          %s351 = smul.addr %s350, 8
          %s352 = scalar_lea.vmem %s2, %s351
          %s353 = smul.u32 2, %s34
        $region20: #{tpu_custom_call.1} parent=11 // pred_fallthru
          _
        // Predicated region
        $region21: #{tpu_custom_call.1} parent=11 // pred_check
          %p354 = pneg %p139
        $region22: #{tpu_custom_call.1} parent=11 // pred_check_branch
          %356 = sbr.rel (%p354) target = $region24
        $region23: #{tpu_custom_call.1} parent=11 // pred_region
          _
        $region24: #{tpu_custom_call.1} parent=11 // pred_fallthru
          _
        // Predicated region
        $region25: #{tpu_custom_call.1} parent=11 // pred_check
          %p357 = pneg %p160
        $region26: #{tpu_custom_call.1} parent=11 // pred_check_branch
          %359 = sbr.rel (%p357) target = $region28
        $region27: #{tpu_custom_call.1} parent=11 // pred_region
          _
        $region28: #{tpu_custom_call.1} parent=11 // pred_fallthru
          _
        // Predicated region
        $region29: #{tpu_custom_call.1} parent=11 // pred_check
          %p360 = pneg %p285
        $region30: #{tpu_custom_call.1} parent=11 // pred_check_branch
          %362 = sbr.rel (%p360) target = $region32
        $region31: #{tpu_custom_call.1} parent=11 // pred_region
          %s364 = ssub.s32 2048, 2048
          %365 = vsyncadd [#allocation10], %s364
          %s366 = sshll.u32 [#allocation9], 4
          %s367 = int_to_ptr.vmem [resolvable:$true] %s366
          %372 = dma.hbm_to_vmem [thread:$0]  %s9, 2048, %s367, [#allocation10], 64, 64, 4
        $region32: #{tpu_custom_call.1} parent=11 // pred_fallthru
          _
        // Predicated region
        $region33: #{tpu_custom_call.1} parent=11 // pred_check
          %p373 = pneg %p306
        $region34: #{tpu_custom_call.1} parent=11 // pred_check_branch
          %375 = sbr.rel (%p373) target = $region36
        $region35: #{tpu_custom_call.1} parent=11 // pred_region
          _
        $region36: #{tpu_custom_call.1} parent=11 // pred_fallthru
          _
      $region12: #{tpu_custom_call.1} parent=5 // pred_fallthru
        _
      %p376 = scmp.lt.s32.totalorder %s22, 4
      // Predicated region
      $region37: #{tpu_custom_call.1} parent=5 // pred_check
        %p377 = pneg %p376
      $region38: #{tpu_custom_call.1} parent=5 // pred_check_branch
        %379 = sbr.rel (%p377) target = $region40
      $region39: #{tpu_custom_call.1} parent=5 // pred_region
        // Predicated region
        $region41: #{tpu_custom_call.1} parent=39 // pred_check
          %p380 = pneg %p86
        $region42: #{tpu_custom_call.1} parent=39 // pred_check_branch
          %382 = sbr.rel (%p380) target = $region44
        $region43: #{tpu_custom_call.1} parent=39 // pred_region
          %s383 = ssub.s32 1, %s30
          %s384 = smul.u32 %s31, %s383
          %s385 = smul.u32 2, %s384
          %p386 = scmp.lt.s32.totalorder %s385, 1
          %s387 = scalar_select %p386, %s385, 1
          %s388 = smul.addr %s387, 4
          %s389 = scalar_lea.vmem %s1, %s388
          %s390 = ssub.s32 1, %s30
          %s391 = smul.u32 %s31, %s390
          %s392 = smul.u32 2, %s391
        $region44: #{tpu_custom_call.1} parent=39 // pred_fallthru
          _
        // Predicated region
        $region45: #{tpu_custom_call.1} parent=39 // pred_check
          %p393 = pneg %p180
        $region46: #{tpu_custom_call.1} parent=39 // pred_check_branch
          %395 = sbr.rel (%p393) target = $region48
        $region47: #{tpu_custom_call.1} parent=39 // pred_region
          %s396 = sand.u32 %s170, 1
          %s397 = scalar_lea.sflag [#allocation7], %s396
          %s398 = sand.u32 %s170, 1
          %s399 = smul.addr %s398, 128
          %s400 = scalar_lea.vmem [#allocation6], %s399
          %s402 = ssub.s32 2048, 2048
          %403 = vsyncadd %s397, %s402
          %s404 = smul.addr %s29, 32
          %s405 = smul.addr %s404, 64
          %s406 = scalar_lea.hbm %s5, %s405
          %s407 = sshll.u32 %s400, 4
          %s408 = int_to_ptr.vmem [resolvable:$true] %s407
          %413 = dma.hbm_to_vmem [thread:$0]  %s406, 2048, %s408, %s397, 64, 64, 4
        $region48: #{tpu_custom_call.1} parent=39 // pred_fallthru
          _
        // Predicated region
        $region49: #{tpu_custom_call.1} parent=39 // pred_check
          %p414 = pneg %p206
        $region50: #{tpu_custom_call.1} parent=39 // pred_check_branch
          %416 = sbr.rel (%p414) target = $region52
        $region51: #{tpu_custom_call.1} parent=39 // pred_region
          %p417 = scmp.lt.s32.totalorder %s29, 1
          %s418 = scalar_select %p417, %s29, 1
          %s419 = scalar_lea.vmem %s6, %s418
        $region52: #{tpu_custom_call.1} parent=39 // pred_fallthru
          _
        // Predicated region
        $region53: #{tpu_custom_call.1} parent=39 // pred_check
          %p420 = pneg %p232
        $region54: #{tpu_custom_call.1} parent=39 // pred_check_branch
          %422 = sbr.rel (%p420) target = $region56
        $region55: #{tpu_custom_call.1} parent=39 // pred_region
          %p423 = scmp.lt.s32.totalorder %s29, 1
          %s424 = scalar_select %p423, %s29, 1
          %s425 = scalar_lea.vmem %s7, %s424
        $region56: #{tpu_custom_call.1} parent=39 // pred_fallthru
          _
        // Predicated region
        $region57: #{tpu_custom_call.1} parent=39 // pred_check
          %p426 = pneg %p258
        $region58: #{tpu_custom_call.1} parent=39 // pred_check_branch
          %428 = sbr.rel (%p426) target = $region60
        $region59: #{tpu_custom_call.1} parent=39 // pred_region
          %p429 = scmp.lt.s32.totalorder %s29, 1
          %s430 = scalar_select %p429, %s29, 1
          %s431 = scalar_lea.vmem %s8, %s430
        $region60: #{tpu_custom_call.1} parent=39 // pred_fallthru
          _
      $region40: #{tpu_custom_call.1} parent=5 // pred_fallthru
        _
      %p432 = scmp.le.s32.totalorder 1, %s22
      %p433 = scmp.lt.s32.totalorder %s22, 5
      %p434 = pnand %p432, %p433
      %p435 = pneg %p434
      // Predicated region
      $region61: #{tpu_custom_call.1} parent=5 // pred_check
        _
      $region62: #{tpu_custom_call.1} parent=5 // pred_check_branch
        %437 = sbr.rel (%p434) target = $region64
      $region63: #{tpu_custom_call.1} parent=5 // pred_region
        %s438 = ssub.s32 %s22, 1
        %s439 = sand.u32 %s173, 1
        %s440 = scalar_lea.sflag [#allocation7], %s439
        %s441 = sand.u32 %s173, 1
        %s442 = smul.addr %s441, 128
        %s443 = scalar_lea.vmem [#allocation6], %s442
        // Predicated region
        $region65: #{tpu_custom_call.1} parent=63 // pred_check
          %p444 = pneg %p186
        $region66: #{tpu_custom_call.1} parent=63 // pred_check_branch
          %446 = sbr.rel (%p444) target = $region68
        $region67: #{tpu_custom_call.1} parent=63 // pred_region
          %447 = dma.done %s440, 2048
        $region68: #{tpu_custom_call.1} parent=63 // pred_fallthru
          _
        // Predicated region
        $region69: #{tpu_custom_call.1} parent=63 // pred_check
          %p448 = pneg %p285
        $region70: #{tpu_custom_call.1} parent=63 // pred_check_branch
          %450 = sbr.rel (%p448) target = $region72
        $region71: #{tpu_custom_call.1} parent=63 // pred_region
          %451 = dma.done [#allocation10], 2048
        $region72: #{tpu_custom_call.1} parent=63 // pred_fallthru
          _
        %p452 = pneg %p62
        %p453 = pneg %p59
        %s454 = ssub.s32 1, %s33
        %s455 = smul.u32 %s34, %s454
        %s456 = smul.u32 2, %s455
        %p457 = scmp.lt.s32.totalorder %s456, 1
        %s458 = scalar_select %p457, %s456, 1
        %s459 = smul.addr %s458, 4
        %s460 = scalar_lea.vmem %s1, %s459
        %p461 = pneg %p92
        %p462 = pneg %p89
        %s463 = smul.u32 2, %s34
        %p464 = scmp.lt.s32.totalorder %s463, 1
        %s465 = scalar_select %p464, %s463, 1
        %s466 = smul.addr %s465, 8
        %s467 = scalar_lea.vmem %s2, %s466
        %p468 = pneg %p118
        %p469 = pneg %p115
        %p470 = pneg %p139
        %p471 = pneg %p136
        %p472 = pneg %p160
        %p473 = pneg %p157
        %s474 = sand.u32 %s173, 1
        %s475 = scalar_lea.sflag [#allocation7], %s474
        %s476 = sand.u32 %s173, 1
        %s477 = smul.addr %s476, 128
        %s478 = scalar_lea.vmem [#allocation6], %s477
        %p479 = pneg %p186
        %p480 = pneg %p183
        %p481 = scmp.lt.s32.totalorder %s32, 1
        %s482 = scalar_select %p481, %s32, 1
        %s483 = scalar_lea.vmem %s6, %s482
        %p484 = pneg %p212
        %p485 = pneg %p209
        %p486 = scmp.lt.s32.totalorder %s32, 1
        %s487 = scalar_select %p486, %s32, 1
        %s488 = scalar_lea.vmem %s7, %s487
        %p489 = pneg %p238
        %p490 = pneg %p235
        %p491 = scmp.lt.s32.totalorder %s32, 1
        %s492 = scalar_select %p491, %s32, 1
        %s493 = scalar_lea.vmem %s8, %s492
        %p494 = pneg %p264
        %p495 = pneg %p261
        %p496 = pneg %p285
        %p497 = pneg %p282
        %p498 = pneg %p306
        %p499 = pneg %p303
        %p500 = pneg %p327
        %p501 = pneg %p324
        %s502 = ssub.s32 1, %s33
        %s503 = smul.u32 %s34, %s502
        %s504 = smul.u32 2, %s503
        %p505 = scmp.lt.s32.totalorder %s504, 1
        %s506 = scalar_select %p505, %s504, 1
        %s507 = smul.addr %s506, 4
        %s508 = scalar_lea.vmem %s1, %s507
        %s509 = ssub.s32 1, %s33
        %s510 = smul.u32 %s34, %s509
        %s511 = smul.u32 2, %s510
        %s512 = smul.u32 2, %s34
        %p513 = scmp.lt.s32.totalorder %s512, 1
        %s514 = scalar_select %p513, %s512, 1
        %s515 = smul.addr %s514, 8
        %s516 = scalar_lea.vmem %s2, %s515
        %s517 = smul.u32 2, %s34
        %p518 = scmp.lt.s32.totalorder %s32, 1
        %s519 = scalar_select %p518, %s32, 1
        %s520 = scalar_lea.vmem %s6, %s519
        %p521 = scmp.lt.s32.totalorder %s32, 1
        %s522 = scalar_select %p521, %s32, 1
        %s523 = scalar_lea.vmem %s7, %s522
        %p524 = scmp.lt.s32.totalorder %s32, 1
        %s525 = scalar_select %p524, %s32, 1
        %s526 = scalar_lea.vmem %s8, %s525
        %s528 = smul.u32 %s34, 16
        %p529 = scmp.eq.s32.totalorder %s32, 0
        %p530 = scmp.eq.s32.totalorder %s33, 0
        %p531 = pnand %p529, %p530
        %p532 = pneg %p531
        %p533 = scmp.eq.s32.totalorder %s34, 0
        %p534 = pnand %p532, %p533
        %p535 = pneg %p534
        // Predicated region
        $region73: #{tpu_custom_call.1} parent=63 // pred_check
          _
        $region74: #{tpu_custom_call.1} parent=63 // pred_check_branch
          %537 = sbr.rel (%p534) target = $region76
        $region75: #{tpu_custom_call.1} parent=63 // pred_region
          %v538 = vld [vmem:[%s0] sm:$0xf]
          %v539 = vld [vmem:[%s0 + $0x4] sm:$0xf]
          %v542 = vunpack.c.l.b16 %v538
          %v543 = vunpack.c.l.b16 %v539
          %v544 = vpack.c.b16 %v543, %v542
          %546 = vst [vmem:[#allocation2] sm:$0xff] %v544
        $region76: #{tpu_custom_call.1} parent=63 // pred_fallthru
          _
        // Predicated region
        $region77: #{tpu_custom_call.1} parent=63 // pred_check
          %p547 = pneg %p530
        $region78: #{tpu_custom_call.1} parent=63 // pred_check_branch
          %549 = sbr.rel (%p547) target = $region80
        $region79: #{tpu_custom_call.1} parent=63 // pred_region
          // Predicated region
          $region81: #{tpu_custom_call.1} parent=79 // pred_check
            %p550 = pneg %p533
          $region82: #{tpu_custom_call.1} parent=79 // pred_check_branch
            %552 = sbr.rel (%p550) target = $region84
          $region83: #{tpu_custom_call.1} parent=79 // pred_region
            %553 = vst [vmem:[#allocation4] sm:$0x1] 0.0
            %554 = vst [vmem:[#allocation5] sm:$0x1] 0.0
          $region84: #{tpu_custom_call.1} parent=79 // pred_fallthru
            _
          %v555 = vld [vmem:[#allocation2] sm:$0xff]
          %v556 = vld [vmem:[%s508] sm:$0xf]
          %v557 = vld [vmem:[%s508 + $0x4] sm:$0xf]
          %v560 = vunpack.c.l.b16 %v556
          %v561 = vunpack.c.l.b16 %v557
          %v562 = vpack.c.b16 %v561, %v560
          %vm563 = vcmask 130048
          %v565 = vsel %vm563, %v562, 0
          %567 = vmatprep.subr.bf16.mxu0 0
          %568 = vmatpush1.bf16.msra.mxu0 %v555
          %569 = vmatprep.subr.bf16.mxu0 0
          %570 = vmatpush1.bf16.msra.mxu0 0
          %571 = vmatprep.subr.bf16.mxu0 0
          %572 = vmatpush1.bf16.msra.mxu0 0
          %573 = vmatprep.subr.bf16.mxu0 0
          %574 = vmatpush1.bf16.msra.mxu0 0
          %575 = vmatprep.subr.bf16.mxu0 0
          %576 = vmatpush1.bf16.msra.mxu0 0
          %577 = vmatprep.subr.bf16.mxu0 0
          %578 = vmatpush1.bf16.msra.mxu0 0
          %579 = vmatprep.subr.bf16.mxu0 0
          %580 = vmatpush1.bf16.msra.mxu0 0
          %581 = vmatprep.subr.bf16.mxu0 0
          %582 = vmatpush1.bf16.msra.mxu0 0
          %583 = vmatprep.subr.bf16.mxu0 0
          %584 = vmatpush1.bf16.msra.mxu0 0
          %585 = vmatprep.subr.bf16.mxu0 0
          %586 = vmatpush1.bf16.msra.mxu0 0
          %587 = vmatprep.subr.bf16.mxu0 0
          %588 = vmatpush1.bf16.msra.mxu0 0
          %589 = vmatprep.subr.bf16.mxu0 0
          %590 = vmatpush1.bf16.msra.mxu0 0
          %591 = vmatprep.subr.bf16.mxu0 0
          %592 = vmatpush1.bf16.msra.mxu0 0
          %593 = vmatprep.subr.bf16.mxu0 0
          %594 = vmatpush1.bf16.msra.mxu0 0
          %595 = vmatprep.subr.bf16.mxu0 0
          %596 = vmatpush1.bf16.msra.mxu0 0
          %597 = vmatprep.subr.bf16.mxu0 0
          %598 = vmatpush1.bf16.msra.mxu0 0
          %599 = vmatprep.mubr.bf16.mxu0 0
          %600 = vmatmul.mubr.bf16.gmra.mrb[0].mxu0 %v565
          %v601 = vpop.f32.mrb[0].mxu0
          %v602 = vadd.f32 0.0, %v601
          %v603 = vpop.f32.mrb[0].mxu0
          %v604 = vpop.f32.mrb[0].mxu0
          %v605 = vadd.f32 0.0, %v604
          %v606 = vpop.f32.mrb[0].mxu0
          %607 = vdwg.mxu0
          %v608 = vld [vmem:[%s516] sm:$0xff]
          %v609 = vld [vmem:[%s516 + $0x8] sm:$0xff]
          %611 = vset.pattern.permute.xlu0 0
          %612 = vperm.xlu0 %611, %v608
          %v613 = vpop.permute.xlu0 %612
          %616 = vset.pattern.permute.xlu0 0
          %617 = vperm.xlu0 %616, %v609
          %v618 = vpop.permute.xlu0 %617
          %v620 = vmul.f32 %v602, %v613
          %v621 = vmul.f32 %v605, %v618
          %s622 = sshra.s32 %s528, 4
          %s623 = sand.u32 %s528, 15
          %s624 = smul.addr %s622, 8
          %s625 = scalar_lea.vmem [#allocation2], %s624
          %v626 = vld [vmem:[%s625] sm:$0xff]
          %v627 = vpack.c.bf16 %v621, %v620
          %v628 = vld [vmem:[%s443] sm:$0xf]
          %v629 = vld [vmem:[%s443 + $0x4] sm:$0xf]
          %v630 = vld [vmem:[%s443 + $0x8] sm:$0xf]
          %v631 = vld [vmem:[%s443 + $0xc] sm:$0xf]
          %v632 = vld [vmem:[%s443 + $0x10] sm:$0xf]
          %v633 = vld [vmem:[%s443 + $0x14] sm:$0xf]
          %v634 = vld [vmem:[%s443 + $0x18] sm:$0xf]
          %v635 = vld [vmem:[%s443 + $0x1c] sm:$0xf]
          %v636 = vld [vmem:[%s443 + $0x20] sm:$0xf]
          %v637 = vld [vmem:[%s443 + $0x24] sm:$0xf]
          %v638 = vld [vmem:[%s443 + $0x28] sm:$0xf]
          %v639 = vld [vmem:[%s443 + $0x2c] sm:$0xf]
          %v640 = vld [vmem:[%s443 + $0x30] sm:$0xf]
          %v641 = vld [vmem:[%s443 + $0x34] sm:$0xf]
          %v642 = vld [vmem:[%s443 + $0x38] sm:$0xf]
          %v643 = vld [vmem:[%s443 + $0x3c] sm:$0xf]
          %s644 = scalar_lea.vmem %s443, 64 [#allocation6]
          %v645 = vld [vmem:[%s644] sm:$0xf]
          %v646 = vld [vmem:[%s644 + $0x4] sm:$0xf]
          %v647 = vld [vmem:[%s644 + $0x8] sm:$0xf]
          %v648 = vld [vmem:[%s644 + $0xc] sm:$0xf]
          %v649 = vld [vmem:[%s644 + $0x10] sm:$0xf]
          %v650 = vld [vmem:[%s644 + $0x14] sm:$0xf]
          %v651 = vld [vmem:[%s644 + $0x18] sm:$0xf]
          %v652 = vld [vmem:[%s644 + $0x1c] sm:$0xf]
          %v653 = vld [vmem:[%s644 + $0x20] sm:$0xf]
          %v654 = vld [vmem:[%s644 + $0x24] sm:$0xf]
          %v655 = vld [vmem:[%s644 + $0x28] sm:$0xf]
          %v656 = vld [vmem:[%s644 + $0x2c] sm:$0xf]
          %v657 = vld [vmem:[%s644 + $0x30] sm:$0xf]
          %v658 = vld [vmem:[%s644 + $0x34] sm:$0xf]
          %v659 = vld [vmem:[%s644 + $0x38] sm:$0xf]
          %v660 = vld [vmem:[%s644 + $0x3c] sm:$0xf]
          %v677 = vunpack.c.l.b16 %v645
          %v678 = vunpack.c.l.b16 %v646
          %v679 = vunpack.c.l.b16 %v647
          %v680 = vunpack.c.l.b16 %v648
          %v681 = vunpack.c.l.b16 %v649
          %v682 = vunpack.c.l.b16 %v650
          %v683 = vunpack.c.l.b16 %v651
          %v684 = vunpack.c.l.b16 %v652
          %v685 = vunpack.c.l.b16 %v653
          %v686 = vunpack.c.l.b16 %v654
          %v687 = vunpack.c.l.b16 %v655
          %v688 = vunpack.c.l.b16 %v656
          %v689 = vunpack.c.l.b16 %v657
          %v690 = vunpack.c.l.b16 %v658
          %v691 = vunpack.c.l.b16 %v659
          %v692 = vunpack.c.l.b16 %v660
          %v693 = vpack.c.b16 %v678, %v677
          %v694 = vpack.c.b16 %v680, %v679
          %v695 = vpack.c.b16 %v682, %v681
          %v696 = vpack.c.b16 %v684, %v683
          %v697 = vpack.c.b16 %v686, %v685
          %v698 = vpack.c.b16 %v688, %v687
          %v699 = vpack.c.b16 %v690, %v689
          %v700 = vpack.c.b16 %v692, %v691
          %709 = vmatprep.subr.bf16.mxu0 0
          %710 = vmatpush1.bf16.msra.mxu0 %v693
          %711 = vmatprep.subr.bf16.mxu0 0
          %712 = vmatpush1.bf16.msra.mxu0 %v694
          %713 = vmatprep.subr.bf16.mxu0 0
          %714 = vmatpush1.bf16.msra.mxu0 %v695
          %715 = vmatprep.subr.bf16.mxu0 0
          %716 = vmatpush1.bf16.msra.mxu0 %v696
          %717 = vmatprep.subr.bf16.mxu0 0
          %718 = vmatpush1.bf16.msra.mxu0 %v697
          %719 = vmatprep.subr.bf16.mxu0 0
          %720 = vmatpush1.bf16.msra.mxu0 %v698
          %721 = vmatprep.subr.bf16.mxu0 0
          %722 = vmatpush1.bf16.msra.mxu0 %v699
          %723 = vmatprep.subr.bf16.mxu0 0
          %724 = vmatpush1.bf16.msra.mxu0 %v700
          %725 = vmatprep.subr.bf16.mxu0 0
          %726 = vmatpush1.bf16.msra.mxu0 0
          %727 = vmatprep.subr.bf16.mxu0 0
          %728 = vmatpush1.bf16.msra.mxu0 0
          %729 = vmatprep.subr.bf16.mxu0 0
          %730 = vmatpush1.bf16.msra.mxu0 0
          %731 = vmatprep.subr.bf16.mxu0 0
          %732 = vmatpush1.bf16.msra.mxu0 0
          %733 = vmatprep.subr.bf16.mxu0 0
          %734 = vmatpush1.bf16.msra.mxu0 0
          %735 = vmatprep.subr.bf16.mxu0 0
          %736 = vmatpush1.bf16.msra.mxu0 0
          %737 = vmatprep.subr.bf16.mxu0 0
          %738 = vmatpush1.bf16.msra.mxu0 0
          %739 = vmatprep.subr.bf16.mxu0 0
          %740 = vmatpush1.bf16.msra.mxu0 0
          %741 = vmatprep.mubr.bf16.mxu0 0
          %742 = vmatmul.mubr.bf16.gmra.mrb[0].mxu0 %v626
          %v743 = vpop.f32.mrb[0].mxu0
          %v744 = vadd.f32 0.0, %v743
          %v745 = vpop.f32.mrb[0].mxu0
          %v746 = vpop.f32.mrb[0].mxu0
          %v747 = vadd.f32 0.0, %v746
          %v748 = vpop.f32.mrb[0].mxu0
          %749 = vdwg.mxu0
          %v766 = vunpack.c.l.b16 %v628
          %v767 = vunpack.c.l.b16 %v629
          %v768 = vunpack.c.l.b16 %v630
          %v769 = vunpack.c.l.b16 %v631
          %v770 = vunpack.c.l.b16 %v632
          %v771 = vunpack.c.l.b16 %v633
          %v772 = vunpack.c.l.b16 %v634
          %v773 = vunpack.c.l.b16 %v635
          %v774 = vunpack.c.l.b16 %v636
          %v775 = vunpack.c.l.b16 %v637
          %v776 = vunpack.c.l.b16 %v638
          %v777 = vunpack.c.l.b16 %v639
          %v778 = vunpack.c.l.b16 %v640
          %v779 = vunpack.c.l.b16 %v641
          %v780 = vunpack.c.l.b16 %v642
          %v781 = vunpack.c.l.b16 %v643
          %v782 = vpack.c.b16 %v767, %v766
          %v783 = vpack.c.b16 %v769, %v768
          %v784 = vpack.c.b16 %v771, %v770
          %v785 = vpack.c.b16 %v773, %v772
          %v786 = vpack.c.b16 %v775, %v774
          %v787 = vpack.c.b16 %v777, %v776
          %v788 = vpack.c.b16 %v779, %v778
          %v789 = vpack.c.b16 %v781, %v780
          %798 = vmatprep.subr.bf16.mxu0 0
          %799 = vmatpush1.bf16.msra.mxu0 %v782
          %800 = vmatprep.subr.bf16.mxu0 0
          %801 = vmatpush1.bf16.msra.mxu0 %v783
          %802 = vmatprep.subr.bf16.mxu0 0
          %803 = vmatpush1.bf16.msra.mxu0 %v784
          %804 = vmatprep.subr.bf16.mxu0 0
          %805 = vmatpush1.bf16.msra.mxu0 %v785
          %806 = vmatprep.subr.bf16.mxu0 0
          %807 = vmatpush1.bf16.msra.mxu0 %v786
          %808 = vmatprep.subr.bf16.mxu0 0
          %809 = vmatpush1.bf16.msra.mxu0 %v787
          %810 = vmatprep.subr.bf16.mxu0 0
          %811 = vmatpush1.bf16.msra.mxu0 %v788
          %812 = vmatprep.subr.bf16.mxu0 0
          %813 = vmatpush1.bf16.msra.mxu0 %v789
          %814 = vmatprep.subr.bf16.mxu0 0
          %815 = vmatpush1.bf16.msra.mxu0 0
          %816 = vmatprep.subr.bf16.mxu0 0
          %817 = vmatpush1.bf16.msra.mxu0 0
          %818 = vmatprep.subr.bf16.mxu0 0
          %819 = vmatpush1.bf16.msra.mxu0 0
          %820 = vmatprep.subr.bf16.mxu0 0
          %821 = vmatpush1.bf16.msra.mxu0 0
          %822 = vmatprep.subr.bf16.mxu0 0
          %823 = vmatpush1.bf16.msra.mxu0 0
          %824 = vmatprep.subr.bf16.mxu0 0
          %825 = vmatpush1.bf16.msra.mxu0 0
          %826 = vmatprep.subr.bf16.mxu0 0
          %827 = vmatpush1.bf16.msra.mxu0 0
          %828 = vmatprep.subr.bf16.mxu0 0
          %829 = vmatpush1.bf16.msra.mxu0 0
          %830 = vmatprep.mubr.bf16.mxu0 0
          %831 = vmatmul.mubr.bf16.gmra.mrb[0].mxu0 %v627
          %v832 = vpop.f32.mrb[0].mxu0
          %v833 = vadd.f32 %v744, %v832
          %v834 = vpop.f32.mrb[0].mxu0
          %v835 = vpop.f32.mrb[0].mxu0
          %v836 = vadd.f32 %v747, %v835
          %v837 = vpop.f32.mrb[0].mxu0
          %838 = vdwg.mxu0
          %v839 = vld [vmem:[%s520] sm:$0x1]
          %v841 = vlaneseq
          %v842 = vshrl.u32 %v841, 7
          %v843 = vsub.s32 0, %v842
          %v844 = vrot.slane %v839, %v843
          %v846 = vadd.f32 %v833, %v844
          %v847 = vadd.f32 %v836, %v844
          %s848 = scalar_lea.vmem [#allocation3], %s528
          %849 = vst [vmem:[%s848] sm:$0xff] %v846
          %850 = vst [vmem:[%s848 + $0x8] sm:$0xff] %v847
          %v851 = vlaneseq
          %v852 = vshrl.u32 %v851, 7
          %v853 = vadd.s32 %v852, 8
          %v854 = vstv %s528
          %v855 = vadd.s32 %v852, %v854
          %v856 = vadd.s32 %v853, %v854
          %vm857 = vcmp.lt.s32.totalorder %v855, 16
          %vm858 = vcmp.lt.s32.totalorder %v856, 16
          %v859 = vsel %vm857, 1, 0
          %v860 = vsel %vm858, 1, 0
          %vm861 = vcmp.eq.s32.totalorder %v859, 1
          %vm862 = vcmp.eq.s32.totalorder %v860, 1
          %v863 = vsel %vm861, %v846, 0.0
          %v864 = vsel %vm862, %v847, 0.0
          %v865 = vld [vmem:[#allocation4] sm:$0x1]
          %v866 = vadd.f32 %v863, %v864
          %v867 = vrot.slane %v866, 4
          %v868 = vadd.f32 %v866, %v867
          %v869 = vrot.slane %v868, 2
          %v870 = vadd.f32 %v868, %v869
          %v871 = vrot.slane %v870, 1
          %v872 = vadd.f32 %v870, %v871
          %v873 = vadd.f32 %v865, %v872
          %874 = vst [vmem:[#allocation4] sm:$0x1] %v873
          %v875 = vld [vmem:[#allocation5] sm:$0x1]
          %v876 = vmul.f32 %v863, %v846
          %v877 = vmul.f32 %v864, %v847
          %v878 = vadd.f32 %v876, %v877
          %v879 = vrot.slane %v878, 4
          %v880 = vadd.f32 %v878, %v879
          %v881 = vrot.slane %v880, 2
          %v882 = vadd.f32 %v880, %v881
          %v883 = vrot.slane %v882, 1
          %v884 = vadd.f32 %v882, %v883
          %v885 = vadd.f32 %v875, %v884
          %886 = vst [vmem:[#allocation5] sm:$0x1] %v885
        $region80: #{tpu_custom_call.1} parent=63 // pred_fallthru
          _
        %p887 = scmp.eq.s32.totalorder %s33, 1
        // Predicated region
        $region85: #{tpu_custom_call.1} parent=63 // pred_check
          %p888 = pneg %p887
        $region86: #{tpu_custom_call.1} parent=63 // pred_check_branch
          %890 = sbr.rel (%p888) target = $region88
        $region87: #{tpu_custom_call.1} parent=63 // pred_region
          %v891 = vld [vmem:[#allocation4] sm:$0x1]
          %v892 = vmul.f32 %v891, 0.0625
          %v893 = vld [vmem:[#allocation5] sm:$0x1]
          %v894 = vmul.f32 %v893, 0.0625
          %v895 = vmul.f32 %v892, %v892
          %v896 = vsub.f32 %v894, %v895
          %v897 = vmax.f32 %v896, 0.0
          %v898 = vadd.f32 %v897, 1e-05
          %v899 = vrsqrt.pop %v898
          %s900 = scalar_lea.vmem [#allocation3], %s528
          %v901 = vld [vmem:[%s900] sm:$0xff]
          %v902 = vld [vmem:[%s900 + $0x8] sm:$0xff]
          %v904 = vlaneseq
          %v905 = vshrl.u32 %v904, 7
          %v906 = vsub.s32 0, %v905
          %v907 = vrot.slane %v892, %v906
          %v909 = vsub.f32 %v901, %v907
          %v910 = vsub.f32 %v902, %v907
          %v912 = vlaneseq
          %v913 = vshrl.u32 %v912, 7
          %v914 = vsub.s32 0, %v913
          %v915 = vrot.slane %v899, %v914
          %v917 = vmul.f32 %v909, %v915
          %v918 = vmul.f32 %v910, %v915
          %v919 = vld [vmem:[%s523] sm:$0x1]
          %v921 = vlaneseq
          %v922 = vshrl.u32 %v921, 7
          %v923 = vsub.s32 0, %v922
          %v924 = vrot.slane %v919, %v923
          %v926 = vmul.f32 %v917, %v924
          %v927 = vmul.f32 %v918, %v924
          %v928 = vld [vmem:[%s526] sm:$0x1]
          %v930 = vlaneseq
          %v931 = vshrl.u32 %v930, 7
          %v932 = vsub.s32 0, %v931
          %v933 = vrot.slane %v928, %v932
          %v935 = vadd.f32 %v926, %v933
          %v936 = vadd.f32 %v927, %v933
          %v937 = vmax.f32 %v935, 0.0
          %v938 = vmax.f32 %v936, 0.0
          %v939 = vpack.c.bf16 %v938, %v937
          %s940 = sshra.s32 %s528, 4
          %s941 = sand.u32 %s528, 15
          %s942 = smul.addr %s940, 8
          %s943 = scalar_lea.vmem [#allocation2], %s942
          %944 = vst [vmem:[%s943] sm:$0xff] %v939
          %p945 = scmp.eq.s32.totalorder %s32, 1
          %p946 = pnand %p945, %p533
          %p947 = pneg %p946
          // Predicated region
          $region89: #{tpu_custom_call.1} parent=87 // pred_check
            _
          $region90: #{tpu_custom_call.1} parent=87 // pred_check_branch
            %949 = sbr.rel (%p946) target = $region92
          $region91: #{tpu_custom_call.1} parent=87 // pred_region
            %v950 = vld [vmem:[%s3] sm:$0xf]
            %v951 = vld [vmem:[#allocation2] sm:$0xff]
            %vm952 = vcmask 130048
            %v954 = vsel %vm952, %v950, 0
            %956 = vmatprep.subr.bf16.mxu0 0
            %957 = vmatpush1.bf16.msra.mxu0 %v951
            %958 = vmatprep.subr.bf16.mxu0 0
            %959 = vmatpush1.bf16.msra.mxu0 0
            %960 = vmatprep.subr.bf16.mxu0 0
            %961 = vmatpush1.bf16.msra.mxu0 0
            %962 = vmatprep.subr.bf16.mxu0 0
            %963 = vmatpush1.bf16.msra.mxu0 0
            %964 = vmatprep.subr.bf16.mxu0 0
            %965 = vmatpush1.bf16.msra.mxu0 0
            %966 = vmatprep.subr.bf16.mxu0 0
            %967 = vmatpush1.bf16.msra.mxu0 0
            %968 = vmatprep.subr.bf16.mxu0 0
            %969 = vmatpush1.bf16.msra.mxu0 0
            %970 = vmatprep.subr.bf16.mxu0 0
            %971 = vmatpush1.bf16.msra.mxu0 0
            %972 = vmatprep.subr.bf16.mxu0 0
            %973 = vmatpush1.bf16.msra.mxu0 0
            %974 = vmatprep.subr.bf16.mxu0 0
            %975 = vmatpush1.bf16.msra.mxu0 0
            %976 = vmatprep.subr.bf16.mxu0 0
            %977 = vmatpush1.bf16.msra.mxu0 0
            %978 = vmatprep.subr.bf16.mxu0 0
            %979 = vmatpush1.bf16.msra.mxu0 0
            %980 = vmatprep.subr.bf16.mxu0 0
            %981 = vmatpush1.bf16.msra.mxu0 0
            %982 = vmatprep.subr.bf16.mxu0 0
            %983 = vmatpush1.bf16.msra.mxu0 0
            %984 = vmatprep.subr.bf16.mxu0 0
            %985 = vmatpush1.bf16.msra.mxu0 0
            %986 = vmatprep.subr.bf16.mxu0 0
            %987 = vmatpush1.bf16.msra.mxu0 0
            %988 = vmatprep.mubr.bf16.mxu0 0
            %989 = vmatmul.mubr.bf16.gmra.mrb[0].mxu0 %v954
            %v990 = vpop.f32.mrb[0].mxu0
            %v991 = vadd.f32 0.0, %v990
            %v992 = vpop.f32.mrb[0].mxu0
            %v993 = vpop.f32.mrb[0].mxu0
            %v994 = vpop.f32.mrb[0].mxu0
            %995 = vdwg.mxu0
            %v996 = vld [vmem:[%s4] sm:$0xff]
            %998 = vset.pattern.permute.xlu0 0
            %999 = vperm.xlu0 %998, %v996
            %v1000 = vpop.permute.xlu0 %999
            %v1002 = vmul.f32 %v991, %v1000
            %v1003 = vpack.c.bf16 %v1002, %v1002
            %v1004 = vld [vmem:[#allocation9] sm:$0xf]
            %v1005 = vld [vmem:[#allocation9 + $0x4] sm:$0xf]
            %v1006 = vld [vmem:[#allocation9 + $0x8] sm:$0xf]
            %v1007 = vld [vmem:[#allocation9 + $0xc] sm:$0xf]
            %v1008 = vld [vmem:[#allocation9 + $0x10] sm:$0xf]
            %v1009 = vld [vmem:[#allocation9 + $0x14] sm:$0xf]
            %v1010 = vld [vmem:[#allocation9 + $0x18] sm:$0xf]
            %v1011 = vld [vmem:[#allocation9 + $0x1c] sm:$0xf]
            %v1012 = vld [vmem:[#allocation9 + $0x20] sm:$0xf]
            %v1013 = vld [vmem:[#allocation9 + $0x24] sm:$0xf]
            %v1014 = vld [vmem:[#allocation9 + $0x28] sm:$0xf]
            %v1015 = vld [vmem:[#allocation9 + $0x2c] sm:$0xf]
            %v1016 = vld [vmem:[#allocation9 + $0x30] sm:$0xf]
            %v1017 = vld [vmem:[#allocation9 + $0x34] sm:$0xf]
            %v1018 = vld [vmem:[#allocation9 + $0x38] sm:$0xf]
            %v1019 = vld [vmem:[#allocation9 + $0x3c] sm:$0xf]
            %v1020 = vld [vmem:[%s10] sm:$0x1]
            %v1022 = vlaneseq
            %v1023 = vshrl.u32 %v1022, 7
            %v1024 = vsub.s32 0, %v1023
            %v1025 = vrot.slane %v1020, %v1024
            %v1043 = vunpack.c.l.b16 %v1004
            %v1044 = vunpack.c.l.b16 %v1005
            %v1045 = vunpack.c.l.b16 %v1006
            %v1046 = vunpack.c.l.b16 %v1007
            %v1047 = vunpack.c.l.b16 %v1008
            %v1048 = vunpack.c.l.b16 %v1009
            %v1049 = vunpack.c.l.b16 %v1010
            %v1050 = vunpack.c.l.b16 %v1011
            %v1051 = vunpack.c.l.b16 %v1012
            %v1052 = vunpack.c.l.b16 %v1013
            %v1053 = vunpack.c.l.b16 %v1014
            %v1054 = vunpack.c.l.b16 %v1015
            %v1055 = vunpack.c.l.b16 %v1016
            %v1056 = vunpack.c.l.b16 %v1017
            %v1057 = vunpack.c.l.b16 %v1018
            %v1058 = vunpack.c.l.b16 %v1019
            %v1059 = vpack.c.b16 %v1044, %v1043
            %v1060 = vpack.c.b16 %v1046, %v1045
            %v1061 = vpack.c.b16 %v1048, %v1047
            %v1062 = vpack.c.b16 %v1050, %v1049
            %v1063 = vpack.c.b16 %v1052, %v1051
            %v1064 = vpack.c.b16 %v1054, %v1053
            %v1065 = vpack.c.b16 %v1056, %v1055
            %v1066 = vpack.c.b16 %v1058, %v1057
            %1075 = vmatprep.subr.bf16.mxu0 0
            %1076 = vmatpush1.bf16.msra.mxu0 %v1059
            %1077 = vmatprep.subr.bf16.mxu0 0
            %1078 = vmatpush1.bf16.msra.mxu0 %v1060
            %1079 = vmatprep.subr.bf16.mxu0 0
            %1080 = vmatpush1.bf16.msra.mxu0 %v1061
            %1081 = vmatprep.subr.bf16.mxu0 0
            %1082 = vmatpush1.bf16.msra.mxu0 %v1062
            %1083 = vmatprep.subr.bf16.mxu0 0
            %1084 = vmatpush1.bf16.msra.mxu0 %v1063
            %1085 = vmatprep.subr.bf16.mxu0 0
            %1086 = vmatpush1.bf16.msra.mxu0 %v1064
            %1087 = vmatprep.subr.bf16.mxu0 0
            %1088 = vmatpush1.bf16.msra.mxu0 %v1065
            %1089 = vmatprep.subr.bf16.mxu0 0
            %1090 = vmatpush1.bf16.msra.mxu0 %v1066
            %1091 = vmatprep.subr.bf16.mxu0 0
            %1092 = vmatpush1.bf16.msra.mxu0 0
            %1093 = vmatprep.subr.bf16.mxu0 0
            %1094 = vmatpush1.bf16.msra.mxu0 0
            %1095 = vmatprep.subr.bf16.mxu0 0
            %1096 = vmatpush1.bf16.msra.mxu0 0
            %1097 = vmatprep.subr.bf16.mxu0 0
            %1098 = vmatpush1.bf16.msra.mxu0 0
            %1099 = vmatprep.subr.bf16.mxu0 0
            %1100 = vmatpush1.bf16.msra.mxu0 0
            %1101 = vmatprep.subr.bf16.mxu0 0
            %1102 = vmatpush1.bf16.msra.mxu0 0
            %1103 = vmatprep.subr.bf16.mxu0 0
            %1104 = vmatpush1.bf16.msra.mxu0 0
            %1105 = vmatprep.subr.bf16.mxu0 0
            %1106 = vmatpush1.bf16.msra.mxu0 0
            %1107 = vmatprep.mubr.bf16.mxu0 0
            %1108 = vmatmul.mubr.bf16.gmra.mrb[0].mxu0 %v1003
            %v1109 = vpop.f32.mrb[0].mxu0
            %v1110 = vadd.f32 %v1025, %v1109
            %v1111 = vpop.f32.mrb[0].mxu0
            %v1112 = vpop.f32.mrb[0].mxu0
            %v1113 = vpop.f32.mrb[0].mxu0
            %1114 = vdwg.mxu0
            %v1115 = vmax.f32 %v1110, 0.0
            %v1116 = vpack.c.bf16 %v1115, %v1115
            %s1117 = scalar_lea.vmem [#allocation9], 64
            %v1118 = vld [vmem:[%s1117] sm:$0xf]
            %v1119 = vld [vmem:[%s1117 + $0x4] sm:$0xf]
            %v1120 = vld [vmem:[%s1117 + $0x8] sm:$0xf]
            %v1121 = vld [vmem:[%s1117 + $0xc] sm:$0xf]
            %v1122 = vld [vmem:[%s1117 + $0x10] sm:$0xf]
            %v1123 = vld [vmem:[%s1117 + $0x14] sm:$0xf]
            %v1124 = vld [vmem:[%s1117 + $0x18] sm:$0xf]
            %v1125 = vld [vmem:[%s1117 + $0x1c] sm:$0xf]
            %v1126 = vld [vmem:[%s1117 + $0x20] sm:$0xf]
            %v1127 = vld [vmem:[%s1117 + $0x24] sm:$0xf]
            %v1128 = vld [vmem:[%s1117 + $0x28] sm:$0xf]
            %v1129 = vld [vmem:[%s1117 + $0x2c] sm:$0xf]
            %v1130 = vld [vmem:[%s1117 + $0x30] sm:$0xf]
            %v1131 = vld [vmem:[%s1117 + $0x34] sm:$0xf]
            %v1132 = vld [vmem:[%s1117 + $0x38] sm:$0xf]
            %v1133 = vld [vmem:[%s1117 + $0x3c] sm:$0xf]
            %s1134 = scalar_lea.vmem %s10, 1
            %v1135 = vld [vmem:[%s1134] sm:$0x1]
            %v1137 = vlaneseq
            %v1138 = vshrl.u32 %v1137, 7
            %v1139 = vsub.s32 0, %v1138
            %v1140 = vrot.slane %v1135, %v1139
            %v1158 = vunpack.c.l.b16 %v1118
            %v1159 = vunpack.c.l.b16 %v1119
            %v1160 = vunpack.c.l.b16 %v1120
            %v1161 = vunpack.c.l.b16 %v1121
            %v1162 = vunpack.c.l.b16 %v1122
            %v1163 = vunpack.c.l.b16 %v1123
            %v1164 = vunpack.c.l.b16 %v1124
            %v1165 = vunpack.c.l.b16 %v1125
            %v1166 = vunpack.c.l.b16 %v1126
            %v1167 = vunpack.c.l.b16 %v1127
            %v1168 = vunpack.c.l.b16 %v1128
            %v1169 = vunpack.c.l.b16 %v1129
            %v1170 = vunpack.c.l.b16 %v1130
            %v1171 = vunpack.c.l.b16 %v1131
            %v1172 = vunpack.c.l.b16 %v1132
            %v1173 = vunpack.c.l.b16 %v1133
            %v1174 = vpack.c.b16 %v1159, %v1158
            %v1175 = vpack.c.b16 %v1161, %v1160
            %v1176 = vpack.c.b16 %v1163, %v1162
            %v1177 = vpack.c.b16 %v1165, %v1164
            %v1178 = vpack.c.b16 %v1167, %v1166
            %v1179 = vpack.c.b16 %v1169, %v1168
            %v1180 = vpack.c.b16 %v1171, %v1170
            %v1181 = vpack.c.b16 %v1173, %v1172
            %1190 = vmatprep.subr.bf16.mxu0 0
            %1191 = vmatpush1.bf16.msra.mxu0 %v1174
            %1192 = vmatprep.subr.bf16.mxu0 0
            %1193 = vmatpush1.bf16.msra.mxu0 %v1175
            %1194 = vmatprep.subr.bf16.mxu0 0
            %1195 = vmatpush1.bf16.msra.mxu0 %v1176
            %1196 = vmatprep.subr.bf16.mxu0 0
            %1197 = vmatpush1.bf16.msra.mxu0 %v1177
            %1198 = vmatprep.subr.bf16.mxu0 0
            %1199 = vmatpush1.bf16.msra.mxu0 %v1178
            %1200 = vmatprep.subr.bf16.mxu0 0
            %1201 = vmatpush1.bf16.msra.mxu0 %v1179
            %1202 = vmatprep.subr.bf16.mxu0 0
            %1203 = vmatpush1.bf16.msra.mxu0 %v1180
            %1204 = vmatprep.subr.bf16.mxu0 0
            %1205 = vmatpush1.bf16.msra.mxu0 %v1181
            %1206 = vmatprep.subr.bf16.mxu0 0
            %1207 = vmatpush1.bf16.msra.mxu0 0
            %1208 = vmatprep.subr.bf16.mxu0 0
            %1209 = vmatpush1.bf16.msra.mxu0 0
            %1210 = vmatprep.subr.bf16.mxu0 0
            %1211 = vmatpush1.bf16.msra.mxu0 0
            %1212 = vmatprep.subr.bf16.mxu0 0
            %1213 = vmatpush1.bf16.msra.mxu0 0
            %1214 = vmatprep.subr.bf16.mxu0 0
            %1215 = vmatpush1.bf16.msra.mxu0 0
            %1216 = vmatprep.subr.bf16.mxu0 0
            %1217 = vmatpush1.bf16.msra.mxu0 0
            %1218 = vmatprep.subr.bf16.mxu0 0
            %1219 = vmatpush1.bf16.msra.mxu0 0
            %1220 = vmatprep.subr.bf16.mxu0 0
            %1221 = vmatpush1.bf16.msra.mxu0 0
            %1222 = vmatprep.mubr.bf16.mxu0 0
            %1223 = vmatmul.mubr.bf16.gmra.mrb[0].mxu0 %v1116
            %v1224 = vpop.f32.mrb[0].mxu0
            %v1225 = vadd.f32 %v1140, %v1224
            %v1226 = vpop.f32.mrb[0].mxu0
            %v1227 = vpop.f32.mrb[0].mxu0
            %v1228 = vpop.f32.mrb[0].mxu0
            %1229 = vdwg.mxu0
            %1230 = vst [vmem:[#allocation11] sm:$0xff] %v1225
          $region92: #{tpu_custom_call.1} parent=87 // pred_fallthru
            _
        $region88: #{tpu_custom_call.1} parent=63 // pred_fallthru
          _
        // Predicated region
        $region93: #{tpu_custom_call.1} parent=63 // pred_check
          %p1231 = pneg %p324
        $region94: #{tpu_custom_call.1} parent=63 // pred_check_branch
          %1233 = sbr.rel (%p1231) target = $region96
        $region95: #{tpu_custom_call.1} parent=63 // pred_region
          %s1235 = ssub.s32 128, 128
          %1236 = vsyncadd [#allocation8], %s1235
          %s1238 = sshll.u32 [#allocation11], 4
          %s1239 = int_to_ptr.vmem [resolvable:$true] %s1238
          %1241 = dma.vmem_to_hbm [thread:$0]  %s1239, 128, %s11, [#allocation8]
        $region96: #{tpu_custom_call.1} parent=63 // pred_fallthru
          _
        // Predicated region
        $region97: #{tpu_custom_call.1} parent=63 // pred_check
          %p1242 = pneg %p324
        $region98: #{tpu_custom_call.1} parent=63 // pred_check_branch
          %1244 = sbr.rel (%p1242) target = $region100
        $region99: #{tpu_custom_call.1} parent=63 // pred_region
          %1245 = dma.done [#allocation8], 128
        $region100: #{tpu_custom_call.1} parent=63 // pred_fallthru
          _
      $region64: #{tpu_custom_call.1} parent=5 // pred_fallthru
        _
      %p1246 = scmp.le.s32.totalorder 2, %s22
      // Predicated region
      $region101: #{tpu_custom_call.1} parent=5 // pred_check
        %p1247 = pneg %p1246
      $region102: #{tpu_custom_call.1} parent=5 // pred_check_branch
        %1249 = sbr.rel (%p1247) target = $region104
      $region103: #{tpu_custom_call.1} parent=5 // pred_region
        %s1250 = ssub.s32 %s22, 2
      $region104: #{tpu_custom_call.1} parent=5 // pred_fallthru
        _
    $region6: #{tpu_custom_call.1} parent=1 // loop_footer
      %s26 = sadd.s32 1, %s22
    $region7: #{tpu_custom_call.1} parent=1 // loop_footer_branch
      %21 = sbr.rel target = $region3
    $region8: #{tpu_custom_call.1} parent=1 // loop_exit
      _
    %1251 = vsyncpa [#allocation7], 1
    %s1252 = scalar_lea.sflag [#allocation7], 1
    %1253 = vsyncpa %s1252, 1
    %1254 = vsyncpa [#allocation10], 1
    %1255 = vsyncpa [#allocation8], 1
    %s1256 = scalar_lea.sflag [#allocation8], 1
    %1257 = vsyncpa %s1256, 1

</llo_original>
